<compile_context>
chip_gen: v5e
topology: v5e:2x2
jax: 0.10.0
libtpu: 0.0.40
codegen_flags: <defaults>
</compile_context>

<pallas_src>
import numpy as np

import jax
import jax.numpy as jnp
from jax.experimental import pallas as pl
from jax.experimental.pallas import tpu as pltpu

LRELU_SLOPE = 0.2
IN_EPS = 1e-5
_VMEM_LIMIT = 32 * 1024 * 1024  # safe on v5e/v6e (128 MiB) and v7x (64 MiB)


# ------------------------------ fused kernel --------------------------------

def _disc_kernel(p1_ref, w1_ref, b1_ref, s2_ref, w2_ref, b2_ref,
                 s3_ref, w3_ref, b3_ref, o_ref):
    """One batch instance per grid step; the whole 3-layer forward fused."""
    # ---- layer 1: conv1 (im2col patches precomputed) + bias + LeakyReLU ----
    h1 = jnp.dot(p1_ref[0], w1_ref[...],
                 preferred_element_type=jnp.float32)          # (M1, 32) f32
    h1 = h1 + b1_ref[...]
    h1 = jnp.where(h1 > 0.0, h1, LRELU_SLOPE * h1)
    h1 = h1.astype(jnp.bfloat16)                              # MXU operand

    # ---- layer 2: conv2 via per-(i,j) selection-gather + weight matmuls ----
    kk2 = s2_ref.shape[0]
    m2 = s2_ref.shape[1]
    c2 = w2_ref.shape[2]
    acc2 = jnp.zeros((m2, c2), jnp.float32)
    for t in range(kk2):                                      # unrolled, 16 terms
        g = jnp.dot(s2_ref[t], h1,
                    preferred_element_type=jnp.float32)       # exact gather (M2, 32)
        acc2 = acc2 + jnp.dot(g.astype(jnp.bfloat16), w2_ref[t],
                              preferred_element_type=jnp.float32)
    h2 = acc2 + b2_ref[...]                                   # (M2, 64) f32

    # ---- InstanceNorm (biased var, full spatial extent) + LeakyReLU --------
    mean = jnp.mean(h2, axis=0, keepdims=True)                # (1, 64)
    var = jnp.mean(jnp.square(h2 - mean), axis=0, keepdims=True)
    h2 = (h2 - mean) * jax.lax.rsqrt(var + IN_EPS)            # rsqrt -> EUP
    h2 = jnp.where(h2 > 0.0, h2, LRELU_SLOPE * h2)            # (M2, 64) f32

    # ---- layer 3: conv3 (cout = 1): gather + weighted lane-reduce ----------
    kk3 = s3_ref.shape[0]
    m3 = s3_ref.shape[1]
    out = jnp.zeros((m3, 1), jnp.float32)
    for t in range(kk3):                                      # unrolled, 4 terms
        p = jnp.dot(s3_ref[t], h2,
                    preferred_element_type=jnp.float32)       # (M3, 64) f32
        out = out + jnp.sum(p * w3_ref[t], axis=1, keepdims=True)
    out = out + b3_ref[...]
    o_ref[0] = out.astype(o_ref.dtype)


# --------------------------- wrapper-side glue -------------------------------

def _selection_matrices(src_h, src_w, k, stride, pad):
    """0/1 gather matrices: sel[t, dst, src] = 1 iff dst window-pos t reads src.

    Out-of-bounds (zero-padding) positions get all-zero rows, so the matmul
    gather reproduces the conv's zero padding exactly.
    """
    oh = (src_h + 2 * pad - k) // stride + 1
    ow = (src_w + 2 * pad - k) // stride + 1
    sel = np.zeros((k * k, oh * ow, src_h * src_w), np.float32)
    for i in range(k):
        for j in range(k):
            t = i * k + j
            for p in range(oh):
                for q in range(ow):
                    y = stride * p + i - pad
                    x = stride * q + j - pad
                    if 0 <= y < src_h and 0 <= x < src_w:
                        sel[t, p * ow + q, y * src_w + x] = 1.0
    return sel, oh, ow


def _input_patches(x_nhwc, k, stride, pad):
    """im2col for the (tiny) input layer only; jit-fused plain-JAX glue."""
    xp = jnp.pad(x_nhwc, ((0, 0), (pad, pad), (pad, pad), (0, 0)))
    n, hp, wp, c = xp.shape
    oh = (hp - k) // stride + 1
    ow = (wp - k) // stride + 1
    cols = []
    for i in range(k):
        for j in range(k):
            cols.append(xp[:, i:i + stride * oh:stride,
                           j:j + stride * ow:stride, :])
    pat = jnp.stack(cols, axis=3)                      # (N, OH, OW, K*K, C)
    return pat.reshape(n, oh * ow, k * k * c), oh, ow


def discriminator_forward(x_nchw, params):
    """PyTorch-compatible: takes NCHW float input, returns NCHW output."""
    (w1, b1), (w2, b2), (w3, b3) = params
    n = x_nchw.shape[0]
    x = jnp.transpose(x_nchw, (0, 2, 3, 1)).astype(jnp.float32)   # NHWC

    # Layer-1 patches (the only wrapper-side window extraction; ~24 KB total).
    patches1, oh1, ow1 = _input_patches(x, k=4, stride=2, pad=1)   # (N, 64, 48)
    patches1 = patches1.astype(jnp.bfloat16)

    # Weight packing (tiny, jit-fused).
    k1dim, c1 = w1.shape[0] * w1.shape[1] * w1.shape[2], w1.shape[3]
    w1f = w1.reshape(k1dim, c1).astype(jnp.bfloat16)               # (48, 32)
    b1f = b1.reshape(1, c1).astype(jnp.float32)
    c2 = w2.shape[3]
    w2t = w2.reshape(w2.shape[0] * w2.shape[1], w2.shape[2], c2).astype(jnp.bfloat16)  # (16,32,64)
    b2f = b2.reshape(1, c2).astype(jnp.float32)
    w3t = jnp.transpose(w3.reshape(w3.shape[0] * w3.shape[1], w3.shape[2], 1),
                        (0, 2, 1)).astype(jnp.float32)             # (4, 1, 64)
    b3f = b3.reshape(1, 1).astype(jnp.float32)

    # Selection (gather) constants for the in-kernel conv2 / conv3 windows.
    sel2, oh2, ow2 = _selection_matrices(oh1, ow1, k=4, stride=2, pad=1)
    sel3, oh3, ow3 = _selection_matrices(oh2, ow2, k=2, stride=1, pad=1)
    s2 = jnp.asarray(sel2, jnp.bfloat16)                           # (16, 16, 64)
    s3 = jnp.asarray(sel3, jnp.float32)                            # (4, 25, 16)

    m1 = oh1 * ow1
    kk2, m2, _ = s2.shape
    kk3, m3, _ = s3.shape

    out = pl.pallas_call(
        _disc_kernel,
        out_shape=jax.ShapeDtypeStruct((n, m3, 1), jnp.float32),
        grid=(n,),
        in_specs=[
            pl.BlockSpec((1, m1, k1dim), lambda b: (b, 0, 0)),     # patches1
            pl.BlockSpec((k1dim, c1), lambda b: (0, 0)),           # W1
            pl.BlockSpec((1, c1), lambda b: (0, 0)),               # b1
            pl.BlockSpec((kk2, m2, m1), lambda b: (0, 0, 0)),      # S2 gathers
            pl.BlockSpec((kk2, c1, c2), lambda b: (0, 0, 0)),      # W2 per term
            pl.BlockSpec((1, c2), lambda b: (0, 0)),               # b2
            pl.BlockSpec((kk3, m3, m2), lambda b: (0, 0, 0)),      # S3 gathers
            pl.BlockSpec((kk3, 1, c2), lambda b: (0, 0, 0)),       # W3 per term
            pl.BlockSpec((1, 1), lambda b: (0, 0)),                # b3
        ],
        out_specs=pl.BlockSpec((1, m3, 1), lambda b: (b, 0, 0)),
        compiler_params=pltpu.CompilerParams(
            dimension_semantics=("parallel",),
            vmem_limit_bytes=_VMEM_LIMIT,
        ),
    )(patches1, w1f, b1f, s2, w2t, b2f, s3, w3t, b3f)

    return out.reshape(n, 1, oh3, ow3)


# ------------------------------- model setup --------------------------------

# (cout, kernel, stride, pad) for the three conv layers (n = 32 per spec)
_LAYER_CFG = [
    (32, 4, 2, 1),
    (64, 4, 2, 1),
    (1, 2, 1, 1),
]


def init_params(key, input_nc):
    params = []
    cin = input_nc
    for cout, k, _, _ in _LAYER_CFG:
        key, wk, bk = jax.random.split(key, 3)
        w = 0.05 * jax.random.normal(wk, (k, k, cin, cout), jnp.float32)  # HWIO
        b = 0.01 * jax.random.normal(bk, (cout,), jnp.float32)
        params.append((w, b))
        cin = cout
    return params


# ------------------------------- reference ----------------------------------

def _ref_forward(x_nchw, params):
    def conv(x, w, b, s, p):
        y = jax.lax.conv_general_dilated(
            x, w, (s, s), ((p, p), (p, p)),
            dimension_numbers=("NHWC", "HWIO", "NHWC"))
        return y + b

    def lrelu(x):
        return jnp.where(x > 0, x, LRELU_SLOPE * x)

    def inorm(x):
        m = jnp.mean(x, axis=(1, 2), keepdims=True)
        v = jnp.mean(jnp.square(x - m), axis=(1, 2), keepdims=True)
        return (x - m) * jax.lax.rsqrt(v + IN_EPS)

    xh = jnp.transpose(x_nchw, (0, 2, 3, 1)).astype(jnp.float32)
    (w1, b1), (w2, b2), (w3, b3) = params
    xh = lrelu(conv(xh, w1, b1, 2, 1))
    xh = lrelu(inorm(conv(xh, w2, b2, 2, 1)))
    xh = conv(xh, w3, b3, 1, 1)
    return jnp.transpose(xh, (0, 3, 1, 2))


# ---------------------------------- main -------------------------------------

if __name__ == "__main__":
    key = jax.random.PRNGKey(0)
    key, xk = jax.random.split(key)

    input_nc = 3
    # 16 -> 8 (k4 s2 p1) -> 4 (k4 s2 p1) -> 5 (k2 s1 p1)
    x = jax.random.normal(xk, (2, input_nc, 16, 16), jnp.float32)  # NCHW

    params = init_params(jax.random.PRNGKey(42), input_nc)

    fwd = jax.jit(discriminator_forward)
    out = jax.block_until_ready(fwd(x, params))

    assert out.shape == (2, 1, 5, 5), out.shape

    ref = jax.block_until_ready(_ref_forward(x, params))
    # bf16 MXU operands (f32 accumulation) -> slightly looser tolerance.
    if not bool(jnp.allclose(out, ref, atol=2e-2, rtol=2e-2)):
        raise AssertionError("Pallas output mismatch vs pure-JAX reference")

    print("KERNEL_OK")
</pallas_src>

<mosaic_0001>
module attributes {stable_mosaic.version = 11 : i64} {
  func.func @_disc_kernel(%arg0: i32, %arg1: memref<1x64x48xbf16, #tpu.memory_space<vmem>>, %arg2: memref<48x32xbf16, #tpu.memory_space<vmem>>, %arg3: memref<1x32xf32, #tpu.memory_space<vmem>>, %arg4: memref<16x16x64xbf16, #tpu.memory_space<vmem>>, %arg5: memref<16x32x64xbf16, #tpu.memory_space<vmem>>, %arg6: memref<1x64xf32, #tpu.memory_space<vmem>>, %arg7: memref<4x25x16xf32, #tpu.memory_space<vmem>>, %arg8: memref<4x1x64xf32, #tpu.memory_space<vmem>>, %arg9: memref<1x1xf32, #tpu.memory_space<vmem>>, %arg10: memref<1x25x1xf32, #tpu.memory_space<vmem>>) attributes {dimension_semantics = [#tpu.dimension_semantics<parallel>], iteration_bounds = array<i64: 2>, scalar_prefetch = 0 : i64, scratch_operands = 0 : i64, tpu.core_type = #tpu.core_type<tc>, window_params = [{transform_indices = @transform_0, window_bounds = array<i64: 1, 64, 48>}, {pipeline_mode = #tpu.pipeline_mode<synchronous>, transform_indices = @transform_1, window_bounds = array<i64: 48, 32>}, {pipeline_mode = #tpu.pipeline_mode<synchronous>, transform_indices = @transform_2, window_bounds = array<i64: 1, 32>}, {pipeline_mode = #tpu.pipeline_mode<synchronous>, transform_indices = @transform_3, window_bounds = array<i64: 16, 16, 64>}, {pipeline_mode = #tpu.pipeline_mode<synchronous>, transform_indices = @transform_4, window_bounds = array<i64: 16, 32, 64>}, {pipeline_mode = #tpu.pipeline_mode<synchronous>, transform_indices = @transform_5, window_bounds = array<i64: 1, 64>}, {pipeline_mode = #tpu.pipeline_mode<synchronous>, transform_indices = @transform_6, window_bounds = array<i64: 4, 25, 16>}, {pipeline_mode = #tpu.pipeline_mode<synchronous>, transform_indices = @transform_7, window_bounds = array<i64: 4, 1, 64>}, {pipeline_mode = #tpu.pipeline_mode<synchronous>, transform_indices = @transform_8, window_bounds = array<i64: 1, 1>}, {transform_indices = @transform_9, window_bounds = array<i64: 1, 25, 1>}]} {
    %c0 = arith.constant 0 : index
    %c0_0 = arith.constant 0 : index
    %c0_1 = arith.constant 0 : index
    %0 = vector.load %arg1[%c0, %c0_0, %c0_1] : memref<1x64x48xbf16, #tpu.memory_space<vmem>>, vector<1x64x48xbf16>
    %1 = vector.shape_cast %0 : vector<1x64x48xbf16> to vector<64x48xbf16>
    %c0_2 = arith.constant 0 : index
    %c0_3 = arith.constant 0 : index
    %2 = vector.load %arg2[%c0_2, %c0_3] : memref<48x32xbf16, #tpu.memory_space<vmem>>, vector<48x32xbf16>
    %cst = arith.constant dense<0.000000e+00> : vector<64x32xf32>
    %3 = tpu.matmul %1, %2, %cst {dimension_numbers = #tpu.dot_dimension_numbers<[1], [0], [0], [1], [0, 0, 1, 1], [], []>} : vector<64x48xbf16>, vector<48x32xbf16>, vector<64x32xf32> -> vector<64x32xf32>
    %c0_4 = arith.constant 0 : index
    %c0_5 = arith.constant 0 : index
    %4 = vector.load %arg3[%c0_4, %c0_5] : memref<1x32xf32, #tpu.memory_space<vmem>>, vector<1x32xf32>
    %5 = vector.broadcast %4 : vector<1x32xf32> to vector<64x32xf32>
    %6 = arith.addf %3, %5 : vector<64x32xf32>
    %cst_6 = arith.constant 0.000000e+00 : f32
    %7 = vector.broadcast %cst_6 : f32 to vector<64x32xf32>
    %8 = arith.cmpf ogt, %6, %7 : vector<64x32xf32>
    %cst_7 = arith.constant 2.000000e-01 : f32
    %9 = vector.broadcast %cst_7 : f32 to vector<64x32xf32>
    %10 = arith.mulf %9, %6 : vector<64x32xf32>
    %11 = arith.select %8, %6, %10 : vector<64x32xi1>, vector<64x32xf32>
    %12 = arith.truncf %11 : vector<64x32xf32> to vector<64x32xbf16>
    %cst_8 = arith.constant 0.000000e+00 : f32
    %13 = vector.broadcast %cst_8 : f32 to vector<16x64xf32>
    %c0_9 = arith.constant 0 : index
    %c0_10 = arith.constant 0 : index
    %c0_11 = arith.constant 0 : index
    %14 = vector.load %arg4[%c0_9, %c0_10, %c0_11] : memref<16x16x64xbf16, #tpu.memory_space<vmem>>, vector<1x16x64xbf16>
    %15 = vector.shape_cast %14 : vector<1x16x64xbf16> to vector<16x64xbf16>
    %cst_12 = arith.constant dense<0.000000e+00> : vector<16x32xf32>
    %16 = tpu.matmul %15, %12, %cst_12 {dimension_numbers = #tpu.dot_dimension_numbers<[1], [0], [0], [1], [0, 0, 1, 1], [], []>} : vector<16x64xbf16>, vector<64x32xbf16>, vector<16x32xf32> -> vector<16x32xf32>
    %17 = arith.truncf %16 : vector<16x32xf32> to vector<16x32xbf16>
    %c0_13 = arith.constant 0 : index
    %c0_14 = arith.constant 0 : index
    %c0_15 = arith.constant 0 : index
    %18 = vector.load %arg5[%c0_13, %c0_14, %c0_15] : memref<16x32x64xbf16, #tpu.memory_space<vmem>>, vector<1x32x64xbf16>
    %19 = vector.shape_cast %18 : vector<1x32x64xbf16> to vector<32x64xbf16>
    %cst_16 = arith.constant dense<0.000000e+00> : vector<16x64xf32>
    %20 = tpu.matmul %17, %19, %cst_16 {dimension_numbers = #tpu.dot_dimension_numbers<[1], [0], [0], [1], [0, 0, 1, 1], [], []>} : vector<16x32xbf16>, vector<32x64xbf16>, vector<16x64xf32> -> vector<16x64xf32>
    %21 = arith.addf %13, %20 : vector<16x64xf32>
    %c1 = arith.constant 1 : index
    %c0_17 = arith.constant 0 : index
    %c0_18 = arith.constant 0 : index
    %22 = vector.load %arg4[%c1, %c0_17, %c0_18] : memref<16x16x64xbf16, #tpu.memory_space<vmem>>, vector<1x16x64xbf16>
    %23 = vector.shape_cast %22 : vector<1x16x64xbf16> to vector<16x64xbf16>
    %cst_19 = arith.constant dense<0.000000e+00> : vector<16x32xf32>
    %24 = tpu.matmul %23, %12, %cst_19 {dimension_numbers = #tpu.dot_dimension_numbers<[1], [0], [0], [1], [0, 0, 1, 1], [], []>} : vector<16x64xbf16>, vector<64x32xbf16>, vector<16x32xf32> -> vector<16x32xf32>
    %25 = arith.truncf %24 : vector<16x32xf32> to vector<16x32xbf16>
    %c1_20 = arith.constant 1 : index
    %c0_21 = arith.constant 0 : index
    %c0_22 = arith.constant 0 : index
    %26 = vector.load %arg5[%c1_20, %c0_21, %c0_22] : memref<16x32x64xbf16, #tpu.memory_space<vmem>>, vector<1x32x64xbf16>
    %27 = vector.shape_cast %26 : vector<1x32x64xbf16> to vector<32x64xbf16>
    %cst_23 = arith.constant dense<0.000000e+00> : vector<16x64xf32>
    %28 = tpu.matmul %25, %27, %cst_23 {dimension_numbers = #tpu.dot_dimension_numbers<[1], [0], [0], [1], [0, 0, 1, 1], [], []>} : vector<16x32xbf16>, vector<32x64xbf16>, vector<16x64xf32> -> vector<16x64xf32>
    %29 = arith.addf %21, %28 : vector<16x64xf32>
    %c2 = arith.constant 2 : index
    %c0_24 = arith.constant 0 : index
    %c0_25 = arith.constant 0 : index
    %30 = vector.load %arg4[%c2, %c0_24, %c0_25] : memref<16x16x64xbf16, #tpu.memory_space<vmem>>, vector<1x16x64xbf16>
    %31 = vector.shape_cast %30 : vector<1x16x64xbf16> to vector<16x64xbf16>
    %cst_26 = arith.constant dense<0.000000e+00> : vector<16x32xf32>
    %32 = tpu.matmul %31, %12, %cst_26 {dimension_numbers = #tpu.dot_dimension_numbers<[1], [0], [0], [1], [0, 0, 1, 1], [], []>} : vector<16x64xbf16>, vector<64x32xbf16>, vector<16x32xf32> -> vector<16x32xf32>
    %33 = arith.truncf %32 : vector<16x32xf32> to vector<16x32xbf16>
    %c2_27 = arith.constant 2 : index
    %c0_28 = arith.constant 0 : index
    %c0_29 = arith.constant 0 : index
    %34 = vector.load %arg5[%c2_27, %c0_28, %c0_29] : memref<16x32x64xbf16, #tpu.memory_space<vmem>>, vector<1x32x64xbf16>
    %35 = vector.shape_cast %34 : vector<1x32x64xbf16> to vector<32x64xbf16>
    %cst_30 = arith.constant dense<0.000000e+00> : vector<16x64xf32>
    %36 = tpu.matmul %33, %35, %cst_30 {dimension_numbers = #tpu.dot_dimension_numbers<[1], [0], [0], [1], [0, 0, 1, 1], [], []>} : vector<16x32xbf16>, vector<32x64xbf16>, vector<16x64xf32> -> vector<16x64xf32>
    %37 = arith.addf %29, %36 : vector<16x64xf32>
    %c3 = arith.constant 3 : index
    %c0_31 = arith.constant 0 : index
    %c0_32 = arith.constant 0 : index
    %38 = vector.load %arg4[%c3, %c0_31, %c0_32] : memref<16x16x64xbf16, #tpu.memory_space<vmem>>, vector<1x16x64xbf16>
    %39 = vector.shape_cast %38 : vector<1x16x64xbf16> to vector<16x64xbf16>
    %cst_33 = arith.constant dense<0.000000e+00> : vector<16x32xf32>
    %40 = tpu.matmul %39, %12, %cst_33 {dimension_numbers = #tpu.dot_dimension_numbers<[1], [0], [0], [1], [0, 0, 1, 1], [], []>} : vector<16x64xbf16>, vector<64x32xbf16>, vector<16x32xf32> -> vector<16x32xf32>
    %41 = arith.truncf %40 : vector<16x32xf32> to vector<16x32xbf16>
    %c3_34 = arith.constant 3 : index
    %c0_35 = arith.constant 0 : index
    %c0_36 = arith.constant 0 : index
    %42 = vector.load %arg5[%c3_34, %c0_35, %c0_36] : memref<16x32x64xbf16, #tpu.memory_space<vmem>>, vector<1x32x64xbf16>
    %43 = vector.shape_cast %42 : vector<1x32x64xbf16> to vector<32x64xbf16>
    %cst_37 = arith.constant dense<0.000000e+00> : vector<16x64xf32>
    %44 = tpu.matmul %41, %43, %cst_37 {dimension_numbers = #tpu.dot_dimension_numbers<[1], [0], [0], [1], [0, 0, 1, 1], [], []>} : vector<16x32xbf16>, vector<32x64xbf16>, vector<16x64xf32> -> vector<16x64xf32>
    %45 = arith.addf %37, %44 : vector<16x64xf32>
    %c4 = arith.constant 4 : index
    %c0_38 = arith.constant 0 : index
    %c0_39 = arith.constant 0 : index
    %46 = vector.load %arg4[%c4, %c0_38, %c0_39] : memref<16x16x64xbf16, #tpu.memory_space<vmem>>, vector<1x16x64xbf16>
    %47 = vector.shape_cast %46 : vector<1x16x64xbf16> to vector<16x64xbf16>
    %cst_40 = arith.constant dense<0.000000e+00> : vector<16x32xf32>
    %48 = tpu.matmul %47, %12, %cst_40 {dimension_numbers = #tpu.dot_dimension_numbers<[1], [0], [0], [1], [0, 0, 1, 1], [], []>} : vector<16x64xbf16>, vector<64x32xbf16>, vector<16x32xf32> -> vector<16x32xf32>
    %49 = arith.truncf %48 : vector<16x32xf32> to vector<16x32xbf16>
    %c4_41 = arith.constant 4 : index
    %c0_42 = arith.constant 0 : index
    %c0_43 = arith.constant 0 : index
    %50 = vector.load %arg5[%c4_41, %c0_42, %c0_43] : memref<16x32x64xbf16, #tpu.memory_space<vmem>>, vector<1x32x64xbf16>
    %51 = vector.shape_cast %50 : vector<1x32x64xbf16> to vector<32x64xbf16>
    %cst_44 = arith.constant dense<0.000000e+00> : vector<16x64xf32>
    %52 = tpu.matmul %49, %51, %cst_44 {dimension_numbers = #tpu.dot_dimension_numbers<[1], [0], [0], [1], [0, 0, 1, 1], [], []>} : vector<16x32xbf16>, vector<32x64xbf16>, vector<16x64xf32> -> vector<16x64xf32>
    %53 = arith.addf %45, %52 : vector<16x64xf32>
    %c5 = arith.constant 5 : index
    %c0_45 = arith.constant 0 : index
    %c0_46 = arith.constant 0 : index
    %54 = vector.load %arg4[%c5, %c0_45, %c0_46] : memref<16x16x64xbf16, #tpu.memory_space<vmem>>, vector<1x16x64xbf16>
    %55 = vector.shape_cast %54 : vector<1x16x64xbf16> to vector<16x64xbf16>
    %cst_47 = arith.constant dense<0.000000e+00> : vector<16x32xf32>
    %56 = tpu.matmul %55, %12, %cst_47 {dimension_numbers = #tpu.dot_dimension_numbers<[1], [0], [0], [1], [0, 0, 1, 1], [], []>} : vector<16x64xbf16>, vector<64x32xbf16>, vector<16x32xf32> -> vector<16x32xf32>
    %57 = arith.truncf %56 : vector<16x32xf32> to vector<16x32xbf16>
    %c5_48 = arith.constant 5 : index
    %c0_49 = arith.constant 0 : index
    %c0_50 = arith.constant 0 : index
    %58 = vector.load %arg5[%c5_48, %c0_49, %c0_50] : memref<16x32x64xbf16, #tpu.memory_space<vmem>>, vector<1x32x64xbf16>
    %59 = vector.shape_cast %58 : vector<1x32x64xbf16> to vector<32x64xbf16>
    %cst_51 = arith.constant dense<0.000000e+00> : vector<16x64xf32>
    %60 = tpu.matmul %57, %59, %cst_51 {dimension_numbers = #tpu.dot_dimension_numbers<[1], [0], [0], [1], [0, 0, 1, 1], [], []>} : vector<16x32xbf16>, vector<32x64xbf16>, vector<16x64xf32> -> vector<16x64xf32>
    %61 = arith.addf %53, %60 : vector<16x64xf32>
    %c6 = arith.constant 6 : index
    %c0_52 = arith.constant 0 : index
    %c0_53 = arith.constant 0 : index
    %62 = vector.load %arg4[%c6, %c0_52, %c0_53] : memref<16x16x64xbf16, #tpu.memory_space<vmem>>, vector<1x16x64xbf16>
    %63 = vector.shape_cast %62 : vector<1x16x64xbf16> to vector<16x64xbf16>
    %cst_54 = arith.constant dense<0.000000e+00> : vector<16x32xf32>
    %64 = tpu.matmul %63, %12, %cst_54 {dimension_numbers = #tpu.dot_dimension_numbers<[1], [0], [0], [1], [0, 0, 1, 1], [], []>} : vector<16x64xbf16>, vector<64x32xbf16>, vector<16x32xf32> -> vector<16x32xf32>
    %65 = arith.truncf %64 : vector<16x32xf32> to vector<16x32xbf16>
    %c6_55 = arith.constant 6 : index
    %c0_56 = arith.constant 0 : index
    %c0_57 = arith.constant 0 : index
    %66 = vector.load %arg5[%c6_55, %c0_56, %c0_57] : memref<16x32x64xbf16, #tpu.memory_space<vmem>>, vector<1x32x64xbf16>
    %67 = vector.shape_cast %66 : vector<1x32x64xbf16> to vector<32x64xbf16>
    %cst_58 = arith.constant dense<0.000000e+00> : vector<16x64xf32>
    %68 = tpu.matmul %65, %67, %cst_58 {dimension_numbers = #tpu.dot_dimension_numbers<[1], [0], [0], [1], [0, 0, 1, 1], [], []>} : vector<16x32xbf16>, vector<32x64xbf16>, vector<16x64xf32> -> vector<16x64xf32>
    %69 = arith.addf %61, %68 : vector<16x64xf32>
    %c7 = arith.constant 7 : index
    %c0_59 = arith.constant 0 : index
    %c0_60 = arith.constant 0 : index
    %70 = vector.load %arg4[%c7, %c0_59, %c0_60] : memref<16x16x64xbf16, #tpu.memory_space<vmem>>, vector<1x16x64xbf16>
    %71 = vector.shape_cast %70 : vector<1x16x64xbf16> to vector<16x64xbf16>
    %cst_61 = arith.constant dense<0.000000e+00> : vector<16x32xf32>
    %72 = tpu.matmul %71, %12, %cst_61 {dimension_numbers = #tpu.dot_dimension_numbers<[1], [0], [0], [1], [0, 0, 1, 1], [], []>} : vector<16x64xbf16>, vector<64x32xbf16>, vector<16x32xf32> -> vector<16x32xf32>
    %73 = arith.truncf %72 : vector<16x32xf32> to vector<16x32xbf16>
    %c7_62 = arith.constant 7 : index
    %c0_63 = arith.constant 0 : index
    %c0_64 = arith.constant 0 : index
    %74 = vector.load %arg5[%c7_62, %c0_63, %c0_64] : memref<16x32x64xbf16, #tpu.memory_space<vmem>>, vector<1x32x64xbf16>
    %75 = vector.shape_cast %74 : vector<1x32x64xbf16> to vector<32x64xbf16>
    %cst_65 = arith.constant dense<0.000000e+00> : vector<16x64xf32>
    %76 = tpu.matmul %73, %75, %cst_65 {dimension_numbers = #tpu.dot_dimension_numbers<[1], [0], [0], [1], [0, 0, 1, 1], [], []>} : vector<16x32xbf16>, vector<32x64xbf16>, vector<16x64xf32> -> vector<16x64xf32>
    %77 = arith.addf %69, %76 : vector<16x64xf32>
    %c8 = arith.constant 8 : index
    %c0_66 = arith.constant 0 : index
    %c0_67 = arith.constant 0 : index
    %78 = vector.load %arg4[%c8, %c0_66, %c0_67] : memref<16x16x64xbf16, #tpu.memory_space<vmem>>, vector<1x16x64xbf16>
    %79 = vector.shape_cast %78 : vector<1x16x64xbf16> to vector<16x64xbf16>
    %cst_68 = arith.constant dense<0.000000e+00> : vector<16x32xf32>
    %80 = tpu.matmul %79, %12, %cst_68 {dimension_numbers = #tpu.dot_dimension_numbers<[1], [0], [0], [1], [0, 0, 1, 1], [], []>} : vector<16x64xbf16>, vector<64x32xbf16>, vector<16x32xf32> -> vector<16x32xf32>
    %81 = arith.truncf %80 : vector<16x32xf32> to vector<16x32xbf16>
    %c8_69 = arith.constant 8 : index
    %c0_70 = arith.constant 0 : index
    %c0_71 = arith.constant 0 : index
    %82 = vector.load %arg5[%c8_69, %c0_70, %c0_71] : memref<16x32x64xbf16, #tpu.memory_space<vmem>>, vector<1x32x64xbf16>
    %83 = vector.shape_cast %82 : vector<1x32x64xbf16> to vector<32x64xbf16>
    %cst_72 = arith.constant dense<0.000000e+00> : vector<16x64xf32>
    %84 = tpu.matmul %81, %83, %cst_72 {dimension_numbers = #tpu.dot_dimension_numbers<[1], [0], [0], [1], [0, 0, 1, 1], [], []>} : vector<16x32xbf16>, vector<32x64xbf16>, vector<16x64xf32> -> vector<16x64xf32>
    %85 = arith.addf %77, %84 : vector<16x64xf32>
    %c9 = arith.constant 9 : index
    %c0_73 = arith.constant 0 : index
    %c0_74 = arith.constant 0 : index
    %86 = vector.load %arg4[%c9, %c0_73, %c0_74] : memref<16x16x64xbf16, #tpu.memory_space<vmem>>, vector<1x16x64xbf16>
    %87 = vector.shape_cast %86 : vector<1x16x64xbf16> to vector<16x64xbf16>
    %cst_75 = arith.constant dense<0.000000e+00> : vector<16x32xf32>
    %88 = tpu.matmul %87, %12, %cst_75 {dimension_numbers = #tpu.dot_dimension_numbers<[1], [0], [0], [1], [0, 0, 1, 1], [], []>} : vector<16x64xbf16>, vector<64x32xbf16>, vector<16x32xf32> -> vector<16x32xf32>
    %89 = arith.truncf %88 : vector<16x32xf32> to vector<16x32xbf16>
    %c9_76 = arith.constant 9 : index
    %c0_77 = arith.constant 0 : index
    %c0_78 = arith.constant 0 : index
    %90 = vector.load %arg5[%c9_76, %c0_77, %c0_78] : memref<16x32x64xbf16, #tpu.memory_space<vmem>>, vector<1x32x64xbf16>
    %91 = vector.shape_cast %90 : vector<1x32x64xbf16> to vector<32x64xbf16>
    %cst_79 = arith.constant dense<0.000000e+00> : vector<16x64xf32>
    %92 = tpu.matmul %89, %91, %cst_79 {dimension_numbers = #tpu.dot_dimension_numbers<[1], [0], [0], [1], [0, 0, 1, 1], [], []>} : vector<16x32xbf16>, vector<32x64xbf16>, vector<16x64xf32> -> vector<16x64xf32>
    %93 = arith.addf %85, %92 : vector<16x64xf32>
    %c10 = arith.constant 10 : index
    %c0_80 = arith.constant 0 : index
    %c0_81 = arith.constant 0 : index
    %94 = vector.load %arg4[%c10, %c0_80, %c0_81] : memref<16x16x64xbf16, #tpu.memory_space<vmem>>, vector<1x16x64xbf16>
    %95 = vector.shape_cast %94 : vector<1x16x64xbf16> to vector<16x64xbf16>
    %cst_82 = arith.constant dense<0.000000e+00> : vector<16x32xf32>
    %96 = tpu.matmul %95, %12, %cst_82 {dimension_numbers = #tpu.dot_dimension_numbers<[1], [0], [0], [1], [0, 0, 1, 1], [], []>} : vector<16x64xbf16>, vector<64x32xbf16>, vector<16x32xf32> -> vector<16x32xf32>
    %97 = arith.truncf %96 : vector<16x32xf32> to vector<16x32xbf16>
    %c10_83 = arith.constant 10 : index
    %c0_84 = arith.constant 0 : index
    %c0_85 = arith.constant 0 : index
    %98 = vector.load %arg5[%c10_83, %c0_84, %c0_85] : memref<16x32x64xbf16, #tpu.memory_space<vmem>>, vector<1x32x64xbf16>
    %99 = vector.shape_cast %98 : vector<1x32x64xbf16> to vector<32x64xbf16>
    %cst_86 = arith.constant dense<0.000000e+00> : vector<16x64xf32>
    %100 = tpu.matmul %97, %99, %cst_86 {dimension_numbers = #tpu.dot_dimension_numbers<[1], [0], [0], [1], [0, 0, 1, 1], [], []>} : vector<16x32xbf16>, vector<32x64xbf16>, vector<16x64xf32> -> vector<16x64xf32>
    %101 = arith.addf %93, %100 : vector<16x64xf32>
    %c11 = arith.constant 11 : index
    %c0_87 = arith.constant 0 : index
    %c0_88 = arith.constant 0 : index
    %102 = vector.load %arg4[%c11, %c0_87, %c0_88] : memref<16x16x64xbf16, #tpu.memory_space<vmem>>, vector<1x16x64xbf16>
    %103 = vector.shape_cast %102 : vector<1x16x64xbf16> to vector<16x64xbf16>
    %cst_89 = arith.constant dense<0.000000e+00> : vector<16x32xf32>
    %104 = tpu.matmul %103, %12, %cst_89 {dimension_numbers = #tpu.dot_dimension_numbers<[1], [0], [0], [1], [0, 0, 1, 1], [], []>} : vector<16x64xbf16>, vector<64x32xbf16>, vector<16x32xf32> -> vector<16x32xf32>
    %105 = arith.truncf %104 : vector<16x32xf32> to vector<16x32xbf16>
    %c11_90 = arith.constant 11 : index
    %c0_91 = arith.constant 0 : index
    %c0_92 = arith.constant 0 : index
    %106 = vector.load %arg5[%c11_90, %c0_91, %c0_92] : memref<16x32x64xbf16, #tpu.memory_space<vmem>>, vector<1x32x64xbf16>
    %107 = vector.shape_cast %106 : vector<1x32x64xbf16> to vector<32x64xbf16>
    %cst_93 = arith.constant dense<0.000000e+00> : vector<16x64xf32>
    %108 = tpu.matmul %105, %107, %cst_93 {dimension_numbers = #tpu.dot_dimension_numbers<[1], [0], [0], [1], [0, 0, 1, 1], [], []>} : vector<16x32xbf16>, vector<32x64xbf16>, vector<16x64xf32> -> vector<16x64xf32>
    %109 = arith.addf %101, %108 : vector<16x64xf32>
    %c12 = arith.constant 12 : index
    %c0_94 = arith.constant 0 : index
    %c0_95 = arith.constant 0 : index
    %110 = vector.load %arg4[%c12, %c0_94, %c0_95] : memref<16x16x64xbf16, #tpu.memory_space<vmem>>, vector<1x16x64xbf16>
    %111 = vector.shape_cast %110 : vector<1x16x64xbf16> to vector<16x64xbf16>
    %cst_96 = arith.constant dense<0.000000e+00> : vector<16x32xf32>
    %112 = tpu.matmul %111, %12, %cst_96 {dimension_numbers = #tpu.dot_dimension_numbers<[1], [0], [0], [1], [0, 0, 1, 1], [], []>} : vector<16x64xbf16>, vector<64x32xbf16>, vector<16x32xf32> -> vector<16x32xf32>
    %113 = arith.truncf %112 : vector<16x32xf32> to vector<16x32xbf16>
    %c12_97 = arith.constant 12 : index
    %c0_98 = arith.constant 0 : index
    %c0_99 = arith.constant 0 : index
    %114 = vector.load %arg5[%c12_97, %c0_98, %c0_99] : memref<16x32x64xbf16, #tpu.memory_space<vmem>>, vector<1x32x64xbf16>
    %115 = vector.shape_cast %114 : vector<1x32x64xbf16> to vector<32x64xbf16>
    %cst_100 = arith.constant dense<0.000000e+00> : vector<16x64xf32>
    %116 = tpu.matmul %113, %115, %cst_100 {dimension_numbers = #tpu.dot_dimension_numbers<[1], [0], [0], [1], [0, 0, 1, 1], [], []>} : vector<16x32xbf16>, vector<32x64xbf16>, vector<16x64xf32> -> vector<16x64xf32>
    %117 = arith.addf %109, %116 : vector<16x64xf32>
    %c13 = arith.constant 13 : index
    %c0_101 = arith.constant 0 : index
    %c0_102 = arith.constant 0 : index
    %118 = vector.load %arg4[%c13, %c0_101, %c0_102] : memref<16x16x64xbf16, #tpu.memory_space<vmem>>, vector<1x16x64xbf16>
    %119 = vector.shape_cast %118 : vector<1x16x64xbf16> to vector<16x64xbf16>
    %cst_103 = arith.constant dense<0.000000e+00> : vector<16x32xf32>
    %120 = tpu.matmul %119, %12, %cst_103 {dimension_numbers = #tpu.dot_dimension_numbers<[1], [0], [0], [1], [0, 0, 1, 1], [], []>} : vector<16x64xbf16>, vector<64x32xbf16>, vector<16x32xf32> -> vector<16x32xf32>
    %121 = arith.truncf %120 : vector<16x32xf32> to vector<16x32xbf16>
    %c13_104 = arith.constant 13 : index
    %c0_105 = arith.constant 0 : index
    %c0_106 = arith.constant 0 : index
    %122 = vector.load %arg5[%c13_104, %c0_105, %c0_106] : memref<16x32x64xbf16, #tpu.memory_space<vmem>>, vector<1x32x64xbf16>
    %123 = vector.shape_cast %122 : vector<1x32x64xbf16> to vector<32x64xbf16>
    %cst_107 = arith.constant dense<0.000000e+00> : vector<16x64xf32>
    %124 = tpu.matmul %121, %123, %cst_107 {dimension_numbers = #tpu.dot_dimension_numbers<[1], [0], [0], [1], [0, 0, 1, 1], [], []>} : vector<16x32xbf16>, vector<32x64xbf16>, vector<16x64xf32> -> vector<16x64xf32>
    %125 = arith.addf %117, %124 : vector<16x64xf32>
    %c14 = arith.constant 14 : index
    %c0_108 = arith.constant 0 : index
    %c0_109 = arith.constant 0 : index
    %126 = vector.load %arg4[%c14, %c0_108, %c0_109] : memref<16x16x64xbf16, #tpu.memory_space<vmem>>, vector<1x16x64xbf16>
    %127 = vector.shape_cast %126 : vector<1x16x64xbf16> to vector<16x64xbf16>
    %cst_110 = arith.constant dense<0.000000e+00> : vector<16x32xf32>
    %128 = tpu.matmul %127, %12, %cst_110 {dimension_numbers = #tpu.dot_dimension_numbers<[1], [0], [0], [1], [0, 0, 1, 1], [], []>} : vector<16x64xbf16>, vector<64x32xbf16>, vector<16x32xf32> -> vector<16x32xf32>
    %129 = arith.truncf %128 : vector<16x32xf32> to vector<16x32xbf16>
    %c14_111 = arith.constant 14 : index
    %c0_112 = arith.constant 0 : index
    %c0_113 = arith.constant 0 : index
    %130 = vector.load %arg5[%c14_111, %c0_112, %c0_113] : memref<16x32x64xbf16, #tpu.memory_space<vmem>>, vector<1x32x64xbf16>
    %131 = vector.shape_cast %130 : vector<1x32x64xbf16> to vector<32x64xbf16>
    %cst_114 = arith.constant dense<0.000000e+00> : vector<16x64xf32>
    %132 = tpu.matmul %129, %131, %cst_114 {dimension_numbers = #tpu.dot_dimension_numbers<[1], [0], [0], [1], [0, 0, 1, 1], [], []>} : vector<16x32xbf16>, vector<32x64xbf16>, vector<16x64xf32> -> vector<16x64xf32>
    %133 = arith.addf %125, %132 : vector<16x64xf32>
    %c15 = arith.constant 15 : index
    %c0_115 = arith.constant 0 : index
    %c0_116 = arith.constant 0 : index
    %134 = vector.load %arg4[%c15, %c0_115, %c0_116] : memref<16x16x64xbf16, #tpu.memory_space<vmem>>, vector<1x16x64xbf16>
    %135 = vector.shape_cast %134 : vector<1x16x64xbf16> to vector<16x64xbf16>
    %cst_117 = arith.constant dense<0.000000e+00> : vector<16x32xf32>
    %136 = tpu.matmul %135, %12, %cst_117 {dimension_numbers = #tpu.dot_dimension_numbers<[1], [0], [0], [1], [0, 0, 1, 1], [], []>} : vector<16x64xbf16>, vector<64x32xbf16>, vector<16x32xf32> -> vector<16x32xf32>
    %137 = arith.truncf %136 : vector<16x32xf32> to vector<16x32xbf16>
    %c15_118 = arith.constant 15 : index
    %c0_119 = arith.constant 0 : index
    %c0_120 = arith.constant 0 : index
    %138 = vector.load %arg5[%c15_118, %c0_119, %c0_120] : memref<16x32x64xbf16, #tpu.memory_space<vmem>>, vector<1x32x64xbf16>
    %139 = vector.shape_cast %138 : vector<1x32x64xbf16> to vector<32x64xbf16>
    %cst_121 = arith.constant dense<0.000000e+00> : vector<16x64xf32>
    %140 = tpu.matmul %137, %139, %cst_121 {dimension_numbers = #tpu.dot_dimension_numbers<[1], [0], [0], [1], [0, 0, 1, 1], [], []>} : vector<16x32xbf16>, vector<32x64xbf16>, vector<16x64xf32> -> vector<16x64xf32>
    %141 = arith.addf %133, %140 : vector<16x64xf32>
    %c0_122 = arith.constant 0 : index
    %c0_123 = arith.constant 0 : index
    %142 = vector.load %arg6[%c0_122, %c0_123] : memref<1x64xf32, #tpu.memory_space<vmem>>, vector<1x64xf32>
    %143 = vector.broadcast %142 : vector<1x64xf32> to vector<16x64xf32>
    %144 = arith.addf %141, %143 : vector<16x64xf32>
    %cst_124 = arith.constant dense<0.000000e+00> : vector<64xf32>
    %145 = vector.multi_reduction <add>, %144, %cst_124 [0] : vector<16x64xf32> to vector<64xf32>
    %146 = vector.shape_cast %145 : vector<64xf32> to vector<1x64xf32>
    %cst_125 = arith.constant 1.600000e+01 : f32
    %147 = vector.broadcast %cst_125 : f32 to vector<1x64xf32>
    %148 = arith.divf %146, %147 : vector<1x64xf32>
    %149 = vector.broadcast %148 : vector<1x64xf32> to vector<16x64xf32>
    %150 = arith.subf %144, %149 : vector<16x64xf32>
    %151 = arith.mulf %150, %150 : vector<16x64xf32>
    %cst_126 = arith.constant dense<0.000000e+00> : vector<64xf32>
    %152 = vector.multi_reduction <add>, %151, %cst_126 [0] : vector<16x64xf32> to vector<64xf32>
    %153 = vector.shape_cast %152 : vector<64xf32> to vector<1x64xf32>
    %cst_127 = arith.constant 1.600000e+01 : f32
    %154 = vector.broadcast %cst_127 : f32 to vector<1x64xf32>
    %155 = arith.divf %153, %154 : vector<1x64xf32>
    %156 = vector.broadcast %148 : vector<1x64xf32> to vector<16x64xf32>
    %157 = arith.subf %144, %156 : vector<16x64xf32>
    %cst_128 = arith.constant 9.99999974E-6 : f32
    %158 = vector.broadcast %cst_128 : f32 to vector<1x64xf32>
    %159 = arith.addf %155, %158 : vector<1x64xf32>
    %160 = math.rsqrt %159 : vector<1x64xf32>
    %161 = vector.broadcast %160 : vector<1x64xf32> to vector<16x64xf32>
    %162 = arith.mulf %157, %161 : vector<16x64xf32>
    %cst_129 = arith.constant 0.000000e+00 : f32
    %163 = vector.broadcast %cst_129 : f32 to vector<16x64xf32>
    %164 = arith.cmpf ogt, %162, %163 : vector<16x64xf32>
    %cst_130 = arith.constant 2.000000e-01 : f32
    %165 = vector.broadcast %cst_130 : f32 to vector<16x64xf32>
    %166 = arith.mulf %165, %162 : vector<16x64xf32>
    %167 = arith.select %164, %162, %166 : vector<16x64xi1>, vector<16x64xf32>
    %cst_131 = arith.constant 0.000000e+00 : f32
    %168 = vector.broadcast %cst_131 : f32 to vector<25x1xf32>
    %c0_132 = arith.constant 0 : index
    %c0_133 = arith.constant 0 : index
    %c0_134 = arith.constant 0 : index
    %169 = vector.load %arg7[%c0_132, %c0_133, %c0_134] : memref<4x25x16xf32, #tpu.memory_space<vmem>>, vector<1x25x16xf32>
    %170 = vector.shape_cast %169 : vector<1x25x16xf32> to vector<25x16xf32>
    %cst_135 = arith.constant dense<0.000000e+00> : vector<25x64xf32>
    %171 = tpu.matmul %170, %167, %cst_135 {dimension_numbers = #tpu.dot_dimension_numbers<[1], [0], [0], [1], [0, 0, 1, 1], [], []>} : vector<25x16xf32>, vector<16x64xf32>, vector<25x64xf32> -> vector<25x64xf32>
    %c0_136 = arith.constant 0 : index
    %c0_137 = arith.constant 0 : index
    %c0_138 = arith.constant 0 : index
    %172 = vector.load %arg8[%c0_136, %c0_137, %c0_138] : memref<4x1x64xf32, #tpu.memory_space<vmem>>, vector<1x1x64xf32>
    %173 = vector.shape_cast %172 : vector<1x1x64xf32> to vector<1x64xf32>
    %174 = vector.broadcast %173 : vector<1x64xf32> to vector<25x64xf32>
    %175 = arith.mulf %171, %174 : vector<25x64xf32>
    %cst_139 = arith.constant dense<0.000000e+00> : vector<25xf32>
    %176 = vector.multi_reduction <add>, %175, %cst_139 [1] : vector<25x64xf32> to vector<25xf32>
    %177 = vector.shape_cast %176 : vector<25xf32> to vector<25x1xf32>
    %178 = arith.addf %168, %177 : vector<25x1xf32>
    %c1_140 = arith.constant 1 : index
    %c0_141 = arith.constant 0 : index
    %c0_142 = arith.constant 0 : index
    %179 = vector.load %arg7[%c1_140, %c0_141, %c0_142] : memref<4x25x16xf32, #tpu.memory_space<vmem>>, vector<1x25x16xf32>
    %180 = vector.shape_cast %179 : vector<1x25x16xf32> to vector<25x16xf32>
    %cst_143 = arith.constant dense<0.000000e+00> : vector<25x64xf32>
    %181 = tpu.matmul %180, %167, %cst_143 {dimension_numbers = #tpu.dot_dimension_numbers<[1], [0], [0], [1], [0, 0, 1, 1], [], []>} : vector<25x16xf32>, vector<16x64xf32>, vector<25x64xf32> -> vector<25x64xf32>
    %c1_144 = arith.constant 1 : index
    %c0_145 = arith.constant 0 : index
    %c0_146 = arith.constant 0 : index
    %182 = vector.load %arg8[%c1_144, %c0_145, %c0_146] : memref<4x1x64xf32, #tpu.memory_space<vmem>>, vector<1x1x64xf32>
    %183 = vector.shape_cast %182 : vector<1x1x64xf32> to vector<1x64xf32>
    %184 = vector.broadcast %183 : vector<1x64xf32> to vector<25x64xf32>
    %185 = arith.mulf %181, %184 : vector<25x64xf32>
    %cst_147 = arith.constant dense<0.000000e+00> : vector<25xf32>
    %186 = vector.multi_reduction <add>, %185, %cst_147 [1] : vector<25x64xf32> to vector<25xf32>
    %187 = vector.shape_cast %186 : vector<25xf32> to vector<25x1xf32>
    %188 = arith.addf %178, %187 : vector<25x1xf32>
    %c2_148 = arith.constant 2 : index
    %c0_149 = arith.constant 0 : index
    %c0_150 = arith.constant 0 : index
    %189 = vector.load %arg7[%c2_148, %c0_149, %c0_150] : memref<4x25x16xf32, #tpu.memory_space<vmem>>, vector<1x25x16xf32>
    %190 = vector.shape_cast %189 : vector<1x25x16xf32> to vector<25x16xf32>
    %cst_151 = arith.constant dense<0.000000e+00> : vector<25x64xf32>
    %191 = tpu.matmul %190, %167, %cst_151 {dimension_numbers = #tpu.dot_dimension_numbers<[1], [0], [0], [1], [0, 0, 1, 1], [], []>} : vector<25x16xf32>, vector<16x64xf32>, vector<25x64xf32> -> vector<25x64xf32>
    %c2_152 = arith.constant 2 : index
    %c0_153 = arith.constant 0 : index
    %c0_154 = arith.constant 0 : index
    %192 = vector.load %arg8[%c2_152, %c0_153, %c0_154] : memref<4x1x64xf32, #tpu.memory_space<vmem>>, vector<1x1x64xf32>
    %193 = vector.shape_cast %192 : vector<1x1x64xf32> to vector<1x64xf32>
    %194 = vector.broadcast %193 : vector<1x64xf32> to vector<25x64xf32>
    %195 = arith.mulf %191, %194 : vector<25x64xf32>
    %cst_155 = arith.constant dense<0.000000e+00> : vector<25xf32>
    %196 = vector.multi_reduction <add>, %195, %cst_155 [1] : vector<25x64xf32> to vector<25xf32>
    %197 = vector.shape_cast %196 : vector<25xf32> to vector<25x1xf32>
    %198 = arith.addf %188, %197 : vector<25x1xf32>
    %c3_156 = arith.constant 3 : index
    %c0_157 = arith.constant 0 : index
    %c0_158 = arith.constant 0 : index
    %199 = vector.load %arg7[%c3_156, %c0_157, %c0_158] : memref<4x25x16xf32, #tpu.memory_space<vmem>>, vector<1x25x16xf32>
    %200 = vector.shape_cast %199 : vector<1x25x16xf32> to vector<25x16xf32>
    %cst_159 = arith.constant dense<0.000000e+00> : vector<25x64xf32>
    %201 = tpu.matmul %200, %167, %cst_159 {dimension_numbers = #tpu.dot_dimension_numbers<[1], [0], [0], [1], [0, 0, 1, 1], [], []>} : vector<25x16xf32>, vector<16x64xf32>, vector<25x64xf32> -> vector<25x64xf32>
    %c3_160 = arith.constant 3 : index
    %c0_161 = arith.constant 0 : index
    %c0_162 = arith.constant 0 : index
    %202 = vector.load %arg8[%c3_160, %c0_161, %c0_162] : memref<4x1x64xf32, #tpu.memory_space<vmem>>, vector<1x1x64xf32>
    %203 = vector.shape_cast %202 : vector<1x1x64xf32> to vector<1x64xf32>
    %204 = vector.broadcast %203 : vector<1x64xf32> to vector<25x64xf32>
    %205 = arith.mulf %201, %204 : vector<25x64xf32>
    %cst_163 = arith.constant dense<0.000000e+00> : vector<25xf32>
    %206 = vector.multi_reduction <add>, %205, %cst_163 [1] : vector<25x64xf32> to vector<25xf32>
    %207 = vector.shape_cast %206 : vector<25xf32> to vector<25x1xf32>
    %208 = arith.addf %198, %207 : vector<25x1xf32>
    %c0_164 = arith.constant 0 : index
    %c0_165 = arith.constant 0 : index
    %209 = vector.load %arg9[%c0_164, %c0_165] : memref<1x1xf32, #tpu.memory_space<vmem>>, vector<1x1xf32>
    %210 = vector.broadcast %209 : vector<1x1xf32> to vector<25x1xf32>
    %211 = arith.addf %208, %210 : vector<25x1xf32>
    %c0_166 = arith.constant 0 : index
    %c0_167 = arith.constant 0 : index
    %c0_168 = arith.constant 0 : index
    %212 = vector.load %arg10[%c0_166, %c0_167, %c0_168] : memref<1x25x1xf32, #tpu.memory_space<vmem>>, vector<1x25x1xf32>
    %213 = vector.shape_cast %212 : vector<1x25x1xf32> to vector<25x1xf32>
    %214 = vector.shape_cast %211 : vector<25x1xf32> to vector<1x25x1xf32>
    tpu.vector_store %arg10[%c0_166, %c0_167, %c0_168], %214 {strides = array<i32>} : memref<1x25x1xf32, #tpu.memory_space<vmem>>, vector<1x25x1xf32>,
    return
  }
  func.func @transform_0(%arg0: i32) -> (i32, i32, i32) {
    %c0_i32 = arith.constant 0 : i32
    %c0_i32_0 = arith.constant 0 : i32
    %c0_i32_1 = arith.constant 0 : i32
    return %arg0, %c0_i32, %c0_i32_0 : i32, i32, i32
  }
  func.func @transform_1(%arg0: i32) -> (i32, i32) {
    %c0_i32 = arith.constant 0 : i32
    %c0_i32_0 = arith.constant 0 : i32
    %c0_i32_1 = arith.constant 0 : i32
    return %c0_i32, %c0_i32_0 : i32, i32
  }
  func.func @transform_2(%arg0: i32) -> (i32, i32) {
    %c0_i32 = arith.constant 0 : i32
    %c0_i32_0 = arith.constant 0 : i32
    %c0_i32_1 = arith.constant 0 : i32
    return %c0_i32, %c0_i32_0 : i32, i32
  }
  func.func @transform_3(%arg0: i32) -> (i32, i32, i32) {
    %c0_i32 = arith.constant 0 : i32
    %c0_i32_0 = arith.constant 0 : i32
    %c0_i32_1 = arith.constant 0 : i32
    %c0_i32_2 = arith.constant 0 : i32
    return %c0_i32, %c0_i32_0, %c0_i32_1 : i32, i32, i32
  }
  func.func @transform_4(%arg0: i32) -> (i32, i32, i32) {
    %c0_i32 = arith.constant 0 : i32
    %c0_i32_0 = arith.constant 0 : i32
    %c0_i32_1 = arith.constant 0 : i32
    %c0_i32_2 = arith.constant 0 : i32
    return %c0_i32, %c0_i32_0, %c0_i32_1 : i32, i32, i32
  }
  func.func @transform_5(%arg0: i32) -> (i32, i32) {
    %c0_i32 = arith.constant 0 : i32
    %c0_i32_0 = arith.constant 0 : i32
    %c0_i32_1 = arith.constant 0 : i32
    return %c0_i32, %c0_i32_0 : i32, i32
  }
  func.func @transform_6(%arg0: i32) -> (i32, i32, i32) {
    %c0_i32 = arith.constant 0 : i32
    %c0_i32_0 = arith.constant 0 : i32
    %c0_i32_1 = arith.constant 0 : i32
    %c0_i32_2 = arith.constant 0 : i32
    return %c0_i32, %c0_i32_0, %c0_i32_1 : i32, i32, i32
  }
  func.func @transform_7(%arg0: i32) -> (i32, i32, i32) {
    %c0_i32 = arith.constant 0 : i32
    %c0_i32_0 = arith.constant 0 : i32
    %c0_i32_1 = arith.constant 0 : i32
    %c0_i32_2 = arith.constant 0 : i32
    return %c0_i32, %c0_i32_0, %c0_i32_1 : i32, i32, i32
  }
  func.func @transform_8(%arg0: i32) -> (i32, i32) {
    %c0_i32 = arith.constant 0 : i32
    %c0_i32_0 = arith.constant 0 : i32
    %c0_i32_1 = arith.constant 0 : i32
    return %c0_i32, %c0_i32_0 : i32, i32
  }
  func.func @transform_9(%arg0: i32) -> (i32, i32, i32) {
    %c0_i32 = arith.constant 0 : i32
    %c0_i32_0 = arith.constant 0 : i32
    %c0_i32_1 = arith.constant 0 : i32
    return %arg0, %c0_i32, %c0_i32_0 : i32, i32, i32
  }
}

</mosaic_0001>

<llo_original>
// kernel: discriminator_forward.1
$region0: #{discriminator_forward.1}
  #allocation0 [shape = 'u32[]', space=smem, size = 0x4, offset = 0x4, fixed_abs, tag = 'smem constant byte address 0x4 - core index']
  #allocation1 [shape = 'u32[72,128]{1,0:T(1,128)}', space=vmem, size = 0x9000, scoped, tag = 'internal scratch']
  #allocation2 [shape = 'f32[1,1]{1,0:T(1,128)S(1)}', space=vmem, size = 0x200, scoped, tag = 'scoped memory for discriminator_forward.1']
  %s0 = inlined_call_operand.vmem [shape: bf16[2,64,48], index: 0, kind: input, shape index: {}]
  %s1 = inlined_call_operand.vmem [shape: bf16[48,32], index: 1, kind: input, shape index: {}]
  %s2 = inlined_call_operand.vmem [shape: f32[1,32], index: 2, kind: input, shape index: {}]
  %s3 = inlined_call_operand.vmem [shape: bf16[16,16,64], index: 3, kind: input, shape index: {}]
  %s4 = inlined_call_operand.vmem [shape: bf16[16,32,64], index: 4, kind: input, shape index: {}]
  %s5 = inlined_call_operand.vmem [shape: f32[1,64], index: 5, kind: input, shape index: {}]
  %s6 = inlined_call_operand.vmem [shape: f32[4,25,16], index: 6, kind: input, shape index: {}]
  %s7 = inlined_call_operand.vmem [shape: f32[4,1,64], index: 7, kind: input, shape index: {}]
  %s8 = inlined_call_operand.<no memory space> [shape: f32[1,1], index: 8, kind: input, shape index: {}]
  %s9 = inlined_call_operand.vmem [shape: f32[2,25,1], index: 9, kind: output, shape index: {}]
  %s10 = sld [smem:[#allocation0]]
  $region69: #{discriminator_forward.1} parent=0
    _
  %s12 = ssub.s32 1, %s10
  %s13 = scalar_select 0, %s12, %s10
  %v14 = vstv %s8
  %15 = vst [vmem:[#allocation2] sm:$0x1] %v14
  loop: start=0, step=1, limit=4
  $region2: #{discriminator_forward.1} parent=0 // loop_pre_header
    _
  $region3: #{discriminator_forward.1} parent=0 // loop_header
    %s17 = sphi 0, %s21
    %p18 = scmp.ge.s32.totalorder %s17, 4
    %s27 = sphi 0, %s29
    %s30 = sphi 0, %s27
    %s31 = sphi 0, %s30
    %s47 = sphi 0, %s31
    %s51 = sphi 0, %s51
    %s53 = sphi 0, %s51
    %s54 = sphi 0, %s53
    %s68 = sphi 0, %s54
    %s72 = sphi 0, %s72
    %s74 = sphi 0, %s72
    %s75 = sphi 0, %s74
    %s89 = sphi 0, %s75
    %s93 = sphi 0, %s93
    %s95 = sphi 0, %s93
    %s96 = sphi 0, %s95
    %s110 = sphi 0, %s96
    %s114 = sphi 0, %s114
    %s116 = sphi 0, %s114
    %s117 = sphi 0, %s116
    %s131 = sphi 0, %s117
    %s135 = sphi 0, %s135
    %s137 = sphi 0, %s135
    %s138 = sphi 0, %s137
    %s152 = sphi 0, %s138
    %s156 = sphi 0, %s156
    %s158 = sphi 0, %s156
    %s159 = sphi 0, %s158
    %s173 = sphi 0, %s159
    %s177 = sphi 0, %s177
    %s179 = sphi 0, %s177
    %s180 = sphi 0, %s179
    %s194 = sphi 0, %s180
    %s198 = sphi 0, %s198
    %s200 = sphi 0, %s198
    %s201 = sphi 0, %s200
    %s215 = sphi 0, %s201
    %s221 = sphi 0, %s223
    %s224 = sphi 0, %s221
    %s225 = sphi 0, %s224
    %s241 = sphi 0, %s225
  $region4: #{discriminator_forward.1} parent=0 // loop_header_branch
    %20 = sbr.rel (%p18) target = $region8
  $region5: #{discriminator_forward.1} parent=0 // loop_body
    %s22 = ssub.s32 %s17, 1
    %s23 = ssub.s32 %s17, 2
    %s24 = sadd.s32 %s17, 1
    %s25 = ssub.s32 %s17, %s24
    %p26 = scmp.eq.s32.totalorder %s25, 0
    %s28 = sadd.s32 %s27, 1
    %s29 = scalar_select %p26, %s27, %s28
    %p32 = pneg %p26
    %p33 = scmp.eq.s32.totalorder %s17, 1
    %p34 = por %p32, %p33
    %p35 = scmp.ne.s32.totalorder %s27, %s30
    %p36 = scmp.eq.s32.totalorder %s17, 0
    %p37 = por %p35, %p36
    %p38 = scmp.ne.s32.totalorder %s27, %s30
    %p39 = scmp.eq.s32.totalorder %s22, 1
    %p40 = por %p38, %p39
    %p41 = scmp.ne.s32.totalorder %s30, %s31
    %p42 = scmp.eq.s32.totalorder %s22, 0
    %p43 = por %p41, %p42
    %p44 = scmp.ne.s32.totalorder %s30, %s31
    %p45 = scmp.eq.s32.totalorder %s23, 1
    %p46 = por %p44, %p45
    %p48 = scmp.ne.s32.totalorder %s31, %s47
    %p49 = scmp.eq.s32.totalorder %s23, 0
    %p50 = por %p48, %p49
    %s52 = sadd.s32 %s51, 1
    %p55 = scmp.eq.s32.totalorder %s17, 1
    %p56 = scmp.ne.s32.totalorder %s51, %s53
    %p57 = scmp.eq.s32.totalorder %s17, 0
    %p58 = por %p56, %p57
    %p59 = scmp.ne.s32.totalorder %s51, %s53
    %p60 = scmp.eq.s32.totalorder %s22, 1
    %p61 = por %p59, %p60
    %p62 = scmp.ne.s32.totalorder %s53, %s54
    %p63 = scmp.eq.s32.totalorder %s22, 0
    %p64 = por %p62, %p63
    %p65 = scmp.ne.s32.totalorder %s53, %s54
    %p66 = scmp.eq.s32.totalorder %s23, 1
    %p67 = por %p65, %p66
    %p69 = scmp.ne.s32.totalorder %s54, %s68
    %p70 = scmp.eq.s32.totalorder %s23, 0
    %p71 = por %p69, %p70
    %s73 = sadd.s32 %s72, 1
    %p76 = scmp.eq.s32.totalorder %s17, 1
    %p77 = scmp.ne.s32.totalorder %s72, %s74
    %p78 = scmp.eq.s32.totalorder %s17, 0
    %p79 = por %p77, %p78
    %p80 = scmp.ne.s32.totalorder %s72, %s74
    %p81 = scmp.eq.s32.totalorder %s22, 1
    %p82 = por %p80, %p81
    %p83 = scmp.ne.s32.totalorder %s74, %s75
    %p84 = scmp.eq.s32.totalorder %s22, 0
    %p85 = por %p83, %p84
    %p86 = scmp.ne.s32.totalorder %s74, %s75
    %p87 = scmp.eq.s32.totalorder %s23, 1
    %p88 = por %p86, %p87
    %p90 = scmp.ne.s32.totalorder %s75, %s89
    %p91 = scmp.eq.s32.totalorder %s23, 0
    %p92 = por %p90, %p91
    %s94 = sadd.s32 %s93, 1
    %p97 = scmp.eq.s32.totalorder %s17, 1
    %p98 = scmp.ne.s32.totalorder %s93, %s95
    %p99 = scmp.eq.s32.totalorder %s17, 0
    %p100 = por %p98, %p99
    %p101 = scmp.ne.s32.totalorder %s93, %s95
    %p102 = scmp.eq.s32.totalorder %s22, 1
    %p103 = por %p101, %p102
    %p104 = scmp.ne.s32.totalorder %s95, %s96
    %p105 = scmp.eq.s32.totalorder %s22, 0
    %p106 = por %p104, %p105
    %p107 = scmp.ne.s32.totalorder %s95, %s96
    %p108 = scmp.eq.s32.totalorder %s23, 1
    %p109 = por %p107, %p108
    %p111 = scmp.ne.s32.totalorder %s96, %s110
    %p112 = scmp.eq.s32.totalorder %s23, 0
    %p113 = por %p111, %p112
    %s115 = sadd.s32 %s114, 1
    %p118 = scmp.eq.s32.totalorder %s17, 1
    %p119 = scmp.ne.s32.totalorder %s114, %s116
    %p120 = scmp.eq.s32.totalorder %s17, 0
    %p121 = por %p119, %p120
    %p122 = scmp.ne.s32.totalorder %s114, %s116
    %p123 = scmp.eq.s32.totalorder %s22, 1
    %p124 = por %p122, %p123
    %p125 = scmp.ne.s32.totalorder %s116, %s117
    %p126 = scmp.eq.s32.totalorder %s22, 0
    %p127 = por %p125, %p126
    %p128 = scmp.ne.s32.totalorder %s116, %s117
    %p129 = scmp.eq.s32.totalorder %s23, 1
    %p130 = por %p128, %p129
    %p132 = scmp.ne.s32.totalorder %s117, %s131
    %p133 = scmp.eq.s32.totalorder %s23, 0
    %p134 = por %p132, %p133
    %s136 = sadd.s32 %s135, 1
    %p139 = scmp.eq.s32.totalorder %s17, 1
    %p140 = scmp.ne.s32.totalorder %s135, %s137
    %p141 = scmp.eq.s32.totalorder %s17, 0
    %p142 = por %p140, %p141
    %p143 = scmp.ne.s32.totalorder %s135, %s137
    %p144 = scmp.eq.s32.totalorder %s22, 1
    %p145 = por %p143, %p144
    %p146 = scmp.ne.s32.totalorder %s137, %s138
    %p147 = scmp.eq.s32.totalorder %s22, 0
    %p148 = por %p146, %p147
    %p149 = scmp.ne.s32.totalorder %s137, %s138
    %p150 = scmp.eq.s32.totalorder %s23, 1
    %p151 = por %p149, %p150
    %p153 = scmp.ne.s32.totalorder %s138, %s152
    %p154 = scmp.eq.s32.totalorder %s23, 0
    %p155 = por %p153, %p154
    %s157 = sadd.s32 %s156, 1
    %p160 = scmp.eq.s32.totalorder %s17, 1
    %p161 = scmp.ne.s32.totalorder %s156, %s158
    %p162 = scmp.eq.s32.totalorder %s17, 0
    %p163 = por %p161, %p162
    %p164 = scmp.ne.s32.totalorder %s156, %s158
    %p165 = scmp.eq.s32.totalorder %s22, 1
    %p166 = por %p164, %p165
    %p167 = scmp.ne.s32.totalorder %s158, %s159
    %p168 = scmp.eq.s32.totalorder %s22, 0
    %p169 = por %p167, %p168
    %p170 = scmp.ne.s32.totalorder %s158, %s159
    %p171 = scmp.eq.s32.totalorder %s23, 1
    %p172 = por %p170, %p171
    %p174 = scmp.ne.s32.totalorder %s159, %s173
    %p175 = scmp.eq.s32.totalorder %s23, 0
    %p176 = por %p174, %p175
    %s178 = sadd.s32 %s177, 1
    %p181 = scmp.eq.s32.totalorder %s17, 1
    %p182 = scmp.ne.s32.totalorder %s177, %s179
    %p183 = scmp.eq.s32.totalorder %s17, 0
    %p184 = por %p182, %p183
    %p185 = scmp.ne.s32.totalorder %s177, %s179
    %p186 = scmp.eq.s32.totalorder %s22, 1
    %p187 = por %p185, %p186
    %p188 = scmp.ne.s32.totalorder %s179, %s180
    %p189 = scmp.eq.s32.totalorder %s22, 0
    %p190 = por %p188, %p189
    %p191 = scmp.ne.s32.totalorder %s179, %s180
    %p192 = scmp.eq.s32.totalorder %s23, 1
    %p193 = por %p191, %p192
    %p195 = scmp.ne.s32.totalorder %s180, %s194
    %p196 = scmp.eq.s32.totalorder %s23, 0
    %p197 = por %p195, %p196
    %s199 = sadd.s32 %s198, 1
    %p202 = scmp.eq.s32.totalorder %s17, 1
    %p203 = scmp.ne.s32.totalorder %s198, %s200
    %p204 = scmp.eq.s32.totalorder %s17, 0
    %p205 = por %p203, %p204
    %p206 = scmp.ne.s32.totalorder %s198, %s200
    %p207 = scmp.eq.s32.totalorder %s22, 1
    %p208 = por %p206, %p207
    %p209 = scmp.ne.s32.totalorder %s200, %s201
    %p210 = scmp.eq.s32.totalorder %s22, 0
    %p211 = por %p209, %p210
    %p212 = scmp.ne.s32.totalorder %s200, %s201
    %p213 = scmp.eq.s32.totalorder %s23, 1
    %p214 = por %p212, %p213
    %p216 = scmp.ne.s32.totalorder %s201, %s215
    %p217 = scmp.eq.s32.totalorder %s23, 0
    %p218 = por %p216, %p217
    %s219 = ssub.s32 %s17, %s24
    %p220 = scmp.eq.s32.totalorder %s219, 0
    %s222 = sadd.s32 %s221, 1
    %s223 = scalar_select %p220, %s221, %s222
    %p226 = pneg %p220
    %p227 = scmp.eq.s32.totalorder %s17, 1
    %p228 = por %p226, %p227
    %p229 = scmp.ne.s32.totalorder %s221, %s224
    %p230 = scmp.eq.s32.totalorder %s17, 0
    %p231 = por %p229, %p230
    %p232 = scmp.ne.s32.totalorder %s221, %s224
    %p233 = scmp.eq.s32.totalorder %s22, 1
    %p234 = por %p232, %p233
    %p235 = scmp.ne.s32.totalorder %s224, %s225
    %p236 = scmp.eq.s32.totalorder %s22, 0
    %p237 = por %p235, %p236
    %p238 = scmp.ne.s32.totalorder %s224, %s225
    %p239 = scmp.eq.s32.totalorder %s23, 1
    %p240 = por %p238, %p239
    %p242 = scmp.ne.s32.totalorder %s225, %s241
    %p243 = scmp.eq.s32.totalorder %s23, 0
    %p244 = por %p242, %p243
    %p245 = scmp.le.s32.totalorder 1, %s17
    %p246 = scmp.lt.s32.totalorder %s17, 3
    %p247 = pnand %p245, %p246
    %p248 = pneg %p247
    // Predicated region
    $region9: #{discriminator_forward.1} parent=5 // pred_check
      _
    $region10: #{discriminator_forward.1} parent=5 // pred_check_branch
      %250 = sbr.rel (%p247) target = $region12
    $region11: #{discriminator_forward.1} parent=5 // pred_region
      %s251 = ssub.s32 %s17, 1
      // Predicated region
      $region13: #{discriminator_forward.1} parent=11 // pred_check
        %p252 = pneg %p64
      $region14: #{discriminator_forward.1} parent=11 // pred_check_branch
        %254 = sbr.rel (%p252) target = $region16
      $region15: #{discriminator_forward.1} parent=11 // pred_region
        _
      $region16: #{discriminator_forward.1} parent=11 // pred_fallthru
        _
      // Predicated region
      $region17: #{discriminator_forward.1} parent=11 // pred_check
        %p255 = pneg %p85
      $region18: #{discriminator_forward.1} parent=11 // pred_check_branch
        %257 = sbr.rel (%p255) target = $region20
      $region19: #{discriminator_forward.1} parent=11 // pred_region
        _
      $region20: #{discriminator_forward.1} parent=11 // pred_fallthru
        _
      // Predicated region
      $region21: #{discriminator_forward.1} parent=11 // pred_check
        %p258 = pneg %p106
      $region22: #{discriminator_forward.1} parent=11 // pred_check_branch
        %260 = sbr.rel (%p258) target = $region24
      $region23: #{discriminator_forward.1} parent=11 // pred_region
        _
      $region24: #{discriminator_forward.1} parent=11 // pred_fallthru
        _
      // Predicated region
      $region25: #{discriminator_forward.1} parent=11 // pred_check
        %p261 = pneg %p127
      $region26: #{discriminator_forward.1} parent=11 // pred_check_branch
        %263 = sbr.rel (%p261) target = $region28
      $region27: #{discriminator_forward.1} parent=11 // pred_region
        _
      $region28: #{discriminator_forward.1} parent=11 // pred_fallthru
        _
      // Predicated region
      $region29: #{discriminator_forward.1} parent=11 // pred_check
        %p264 = pneg %p148
      $region30: #{discriminator_forward.1} parent=11 // pred_check_branch
        %266 = sbr.rel (%p264) target = $region32
      $region31: #{discriminator_forward.1} parent=11 // pred_region
        _
      $region32: #{discriminator_forward.1} parent=11 // pred_fallthru
        _
      // Predicated region
      $region33: #{discriminator_forward.1} parent=11 // pred_check
        %p267 = pneg %p169
      $region34: #{discriminator_forward.1} parent=11 // pred_check_branch
        %269 = sbr.rel (%p267) target = $region36
      $region35: #{discriminator_forward.1} parent=11 // pred_region
        _
      $region36: #{discriminator_forward.1} parent=11 // pred_fallthru
        _
      // Predicated region
      $region37: #{discriminator_forward.1} parent=11 // pred_check
        %p270 = pneg %p190
      $region38: #{discriminator_forward.1} parent=11 // pred_check_branch
        %272 = sbr.rel (%p270) target = $region40
      $region39: #{discriminator_forward.1} parent=11 // pred_region
        _
      $region40: #{discriminator_forward.1} parent=11 // pred_fallthru
        _
      // Predicated region
      $region41: #{discriminator_forward.1} parent=11 // pred_check
        %p273 = pneg %p211
      $region42: #{discriminator_forward.1} parent=11 // pred_check_branch
        %275 = sbr.rel (%p273) target = $region44
      $region43: #{discriminator_forward.1} parent=11 // pred_region
        _
      $region44: #{discriminator_forward.1} parent=11 // pred_fallthru
        _
    $region12: #{discriminator_forward.1} parent=5 // pred_fallthru
      _
    %p276 = scmp.lt.s32.totalorder %s17, 2
    // Predicated region
    $region45: #{discriminator_forward.1} parent=5 // pred_check
      %p277 = pneg %p276
    $region46: #{discriminator_forward.1} parent=5 // pred_check_branch
      %279 = sbr.rel (%p277) target = $region48
    $region47: #{discriminator_forward.1} parent=5 // pred_region
      // Predicated region
      $region49: #{discriminator_forward.1} parent=47 // pred_check
        %p280 = pneg %p37
      $region50: #{discriminator_forward.1} parent=47 // pred_check_branch
        %282 = sbr.rel (%p280) target = $region52
      $region51: #{discriminator_forward.1} parent=47 // pred_region
        %p283 = scmp.lt.s32.totalorder %s17, 1
        %s284 = scalar_select %p283, %s17, 1
        %s285 = smul.addr %s284, 8
        %s286 = smul.addr %s285, 4
        %s287 = scalar_lea.vmem %s0, %s286
      $region52: #{discriminator_forward.1} parent=47 // pred_fallthru
        _
    $region48: #{discriminator_forward.1} parent=5 // pred_fallthru
      _
    %p288 = scmp.le.s32.totalorder 1, %s17
    %p289 = scmp.lt.s32.totalorder %s17, 3
    %p290 = pnand %p288, %p289
    %p291 = pneg %p290
    // Predicated region
    $region53: #{discriminator_forward.1} parent=5 // pred_check
      _
    $region54: #{discriminator_forward.1} parent=5 // pred_check_branch
      %293 = sbr.rel (%p290) target = $region56
    $region55: #{discriminator_forward.1} parent=5 // pred_region
      %s294 = ssub.s32 %s17, 1
      %p295 = scmp.lt.s32.totalorder %s22, 1
      %s296 = scalar_select %p295, %s22, 1
      %s297 = smul.addr %s296, 8
      %s298 = smul.addr %s297, 4
      %s299 = scalar_lea.vmem %s0, %s298
      %p300 = pneg %p43
      %p301 = pneg %p40
      %p302 = pneg %p64
      %p303 = pneg %p61
      %p304 = pneg %p85
      %p305 = pneg %p82
      %p306 = pneg %p106
      %p307 = pneg %p103
      %p308 = pneg %p127
      %p309 = pneg %p124
      %p310 = pneg %p148
      %p311 = pneg %p145
      %p312 = pneg %p169
      %p313 = pneg %p166
      %p314 = pneg %p190
      %p315 = pneg %p187
      %p316 = pneg %p211
      %p317 = pneg %p208
      %p318 = pneg %p237
      %p319 = pneg %p234
      %p320 = scmp.lt.s32.totalorder %s22, 1
      %s321 = scalar_select %p320, %s22, 1
      %s322 = smul.addr %s321, 4
      %s323 = smul.addr %s322, 8
      %s324 = scalar_lea.vmem %s9, %s323
      %p325 = scmp.lt.s32.totalorder %s22, 1
      %s326 = scalar_select %p325, %s22, 1
      %s327 = smul.addr %s326, 8
      %s328 = smul.addr %s327, 4
      %s329 = scalar_lea.vmem %s0, %s328
      %p330 = scmp.lt.s32.totalorder %s22, 1
      %s331 = scalar_select %p330, %s22, 1
      %s332 = smul.addr %s331, 4
      %s333 = smul.addr %s332, 8
      %s334 = scalar_lea.vmem %s9, %s333
      %v336 = vld [vmem:[%s329] sm:$0xf]
      %v337 = vld [vmem:[%s329 + $0x4] sm:$0xf]
      %v338 = vld [vmem:[%s329 + $0x8] sm:$0xf]
      %v339 = vld [vmem:[%s329 + $0xc] sm:$0xf]
      %v340 = vld [vmem:[%s329 + $0x10] sm:$0xf]
      %v341 = vld [vmem:[%s329 + $0x14] sm:$0xf]
      %v342 = vld [vmem:[%s329 + $0x18] sm:$0xf]
      %v343 = vld [vmem:[%s329 + $0x1c] sm:$0xf]
      %v344 = vld [vmem:[%s1] sm:$0xf]
      %v345 = vld [vmem:[%s1 + $0x4] sm:$0xf]
      %v346 = vld [vmem:[%s1 + $0x8] sm:$0xf]
      %v347 = vld [vmem:[%s1 + $0xc] sm:$0xf]
      %v348 = vld [vmem:[%s1 + $0x10] sm:$0xf]
      %v349 = vld [vmem:[%s1 + $0x14] sm:$0xf]
      %v350 = vld [vmem:[%s2] sm:$0x1]
      %v352 = vperm.slane %v350, 0
      %v362 = vunpack.c.l.b16 %v336
      %v363 = vunpack.c.l.b16 %v337
      %v364 = vunpack.c.l.b16 %v338
      %v365 = vunpack.c.l.b16 %v339
      %v366 = vunpack.c.l.b16 %v340
      %v367 = vunpack.c.l.b16 %v341
      %v368 = vunpack.c.l.b16 %v342
      %v369 = vunpack.c.l.b16 %v343
      %v370 = vpack.c.b16 %v363, %v362
      %v371 = vpack.c.b16 %v365, %v364
      %v372 = vpack.c.b16 %v367, %v366
      %v373 = vpack.c.b16 %v369, %v368
      %v380 = vunpack.c.l.b16 %v344
      %v381 = vunpack.c.l.b16 %v345
      %v382 = vunpack.c.l.b16 %v346
      %v383 = vunpack.c.l.b16 %v347
      %v384 = vunpack.c.l.b16 %v348
      %v385 = vunpack.c.l.b16 %v349
      %v386 = vpack.c.b16 %v381, %v380
      %v387 = vpack.c.b16 %v383, %v382
      %v388 = vpack.c.b16 %v385, %v384
      %vm392 = vcmask 392192
      %v394 = vsel %vm392, %v370, 0
      %v397 = vsel %vm392, %v371, 0
      %v400 = vsel %vm392, %v372, 0
      %v403 = vsel %vm392, %v373, 0
      %405 = vmatpush.bf16.msra.mxu0 0
      %406 = vmatpush.bf16.msra.mxu0 0
      %407 = vmatpush.bf16.msra.mxu0 0
      %408 = vmatpush.bf16.msra.mxu0 0
      %409 = vmatpush.bf16.msra.mxu0 0
      %410 = vmatpush.bf16.msra.mxu0 %v388
      %411 = vmatpush.bf16.msra.mxu0 %v387
      %412 = vmatpush.bf16.msra.mxu0 %v386
      %413 = vmatmul.bf16.gmra.mxu0 %v394
      %v414 = vpop.f32.mrf.mxu0
      %v415 = vadd.f32 %v352, %v414
      %v416 = vpop.f32.mrf.mxu0
      %v417 = vadd.f32 %v352, %v416
      %418 = vmatmul.bf16.gmra.mxu0 %v397
      %v419 = vpop.f32.mrf.mxu0
      %v420 = vadd.f32 %v352, %v419
      %v421 = vpop.f32.mrf.mxu0
      %v422 = vadd.f32 %v352, %v421
      %423 = vmatmul.bf16.gmra.mxu0 %v400
      %v424 = vpop.f32.mrf.mxu0
      %v425 = vadd.f32 %v352, %v424
      %v426 = vpop.f32.mrf.mxu0
      %v427 = vadd.f32 %v352, %v426
      %428 = vmatmul.bf16.gmra.mxu0 %v403
      %v429 = vpop.f32.mrf.mxu0
      %v430 = vadd.f32 %v352, %v429
      %v431 = vpop.f32.mrf.mxu0
      %v432 = vadd.f32 %v352, %v431
      %433 = vdwg.mxu0
      %vm434 = vcmp.gt.f32.partialorder %v415, 0.0
      %vm435 = vcmp.gt.f32.partialorder %v417, 0.0
      %vm436 = vcmp.gt.f32.partialorder %v420, 0.0
      %vm437 = vcmp.gt.f32.partialorder %v422, 0.0
      %vm438 = vcmp.gt.f32.partialorder %v425, 0.0
      %vm439 = vcmp.gt.f32.partialorder %v427, 0.0
      %vm440 = vcmp.gt.f32.partialorder %v430, 0.0
      %vm441 = vcmp.gt.f32.partialorder %v432, 0.0
      %v442 = vmul.f32 %v415, 0.2
      %v443 = vmul.f32 %v417, 0.2
      %v444 = vmul.f32 %v420, 0.2
      %v445 = vmul.f32 %v422, 0.2
      %v446 = vmul.f32 %v425, 0.2
      %v447 = vmul.f32 %v427, 0.2
      %v448 = vmul.f32 %v430, 0.2
      %v449 = vmul.f32 %v432, 0.2
      %v450 = vsel %vm434, %v415, %v442
      %v451 = vsel %vm435, %v417, %v443
      %v452 = vsel %vm436, %v420, %v444
      %v453 = vsel %vm437, %v422, %v445
      %v454 = vsel %vm438, %v425, %v446
      %v455 = vsel %vm439, %v427, %v447
      %v456 = vsel %vm440, %v430, %v448
      %v457 = vsel %vm441, %v432, %v449
      %v458 = vpack.c.bf16 %v451, %v450
      %v459 = vpack.c.bf16 %v453, %v452
      %v460 = vpack.c.bf16 %v455, %v454
      %v461 = vpack.c.bf16 %v457, %v456
      %v462 = vld [vmem:[%s3] sm:$0xf]
      %v463 = vld [vmem:[%s3 + $0x4] sm:$0xf]
      %v466 = vunpack.c.l.b16 %v462
      %v467 = vunpack.c.l.b16 %v463
      %v468 = vpack.c.b16 %v467, %v466
      %vm469 = vcmask 523264
      %v471 = vsel %vm469, %v468, 0
      %473 = vmatpush.bf16.msra.mxu0 0
      %474 = vmatpush.bf16.msra.mxu0 0
      %475 = vmatpush.bf16.msra.mxu0 0
      %476 = vmatpush.bf16.msra.mxu0 0
      %477 = vmatpush.bf16.msra.mxu0 %v461
      %478 = vmatpush.bf16.msra.mxu0 %v460
      %479 = vmatpush.bf16.msra.mxu0 %v459
      %480 = vmatpush.bf16.msra.mxu0 %v458
      %481 = vmatmul.bf16.gmra.mxu0 %v471
      %v482 = vpop.f32.mrf.mxu0
      %v483 = vadd.f32 0.0, %v482
      %v484 = vpop.f32.mrf.mxu0
      %v485 = vadd.f32 0.0, %v484
      %486 = vdwg.mxu0
      %v487 = vpack.c.bf16 %v485, %v483
      %v488 = vld [vmem:[%s4] sm:$0xf]
      %v489 = vld [vmem:[%s4 + $0x4] sm:$0xf]
      %v490 = vld [vmem:[%s4 + $0x8] sm:$0xf]
      %v491 = vld [vmem:[%s4 + $0xc] sm:$0xf]
      %s492 = scalar_lea.vmem %s3, 8
      %v493 = vld [vmem:[%s492] sm:$0xf]
      %v494 = vld [vmem:[%s492 + $0x4] sm:$0xf]
      %v497 = vunpack.c.l.b16 %v493
      %v498 = vunpack.c.l.b16 %v494
      %v499 = vpack.c.b16 %v498, %v497
      %v501 = vsel %vm469, %v499, 0
      %503 = vmatpush.bf16.msra.mxu0 0
      %504 = vmatpush.bf16.msra.mxu0 0
      %505 = vmatpush.bf16.msra.mxu0 0
      %506 = vmatpush.bf16.msra.mxu0 0
      %507 = vmatpush.bf16.msra.mxu0 %v461
      %508 = vmatpush.bf16.msra.mxu0 %v460
      %509 = vmatpush.bf16.msra.mxu0 %v459
      %510 = vmatpush.bf16.msra.mxu0 %v458
      %511 = vmatmul.bf16.gmra.mxu0 %v501
      %v512 = vpop.f32.mrf.mxu0
      %v513 = vadd.f32 0.0, %v512
      %v514 = vpop.f32.mrf.mxu0
      %v515 = vadd.f32 0.0, %v514
      %516 = vdwg.mxu0
      %v517 = vpack.c.bf16 %v515, %v513
      %s518 = scalar_lea.vmem %s4, 16
      %v519 = vld [vmem:[%s518] sm:$0xf]
      %v520 = vld [vmem:[%s518 + $0x4] sm:$0xf]
      %v521 = vld [vmem:[%s518 + $0x8] sm:$0xf]
      %v522 = vld [vmem:[%s518 + $0xc] sm:$0xf]
      %v527 = vunpack.c.l.b16 %v519
      %v528 = vunpack.c.l.b16 %v520
      %v529 = vunpack.c.l.b16 %v521
      %v530 = vunpack.c.l.b16 %v522
      %v531 = vpack.c.b16 %v528, %v527
      %v532 = vpack.c.b16 %v530, %v529
      %vm535 = vcmask 261120
      %v537 = vsel %vm535, %v517, 0
      %539 = vmatpush.bf16.msra.mxu0 0
      %540 = vmatpush.bf16.msra.mxu0 0
      %541 = vmatpush.bf16.msra.mxu0 0
      %542 = vmatpush.bf16.msra.mxu0 0
      %543 = vmatpush.bf16.msra.mxu0 0
      %544 = vmatpush.bf16.msra.mxu0 0
      %545 = vmatpush.bf16.msra.mxu0 %v532
      %546 = vmatpush.bf16.msra.mxu0 %v531
      %547 = vmatmul.bf16.gmra.mxu0 %v537
      %v548 = vpop.f32.mrf.mxu0
      %v549 = vadd.f32 0.0, %v548
      %v550 = vpop.f32.mrf.mxu0
      %v551 = vadd.f32 0.0, %v550
      %552 = vdwg.mxu0
      %v557 = vunpack.c.l.b16 %v488
      %v558 = vunpack.c.l.b16 %v489
      %v559 = vunpack.c.l.b16 %v490
      %v560 = vunpack.c.l.b16 %v491
      %v561 = vpack.c.b16 %v558, %v557
      %v562 = vpack.c.b16 %v560, %v559
      %v566 = vsel %vm535, %v487, 0
      %568 = vmatpush.bf16.msra.mxu0 0
      %569 = vmatpush.bf16.msra.mxu0 0
      %570 = vmatpush.bf16.msra.mxu0 0
      %571 = vmatpush.bf16.msra.mxu0 0
      %572 = vmatpush.bf16.msra.mxu0 0
      %573 = vmatpush.bf16.msra.mxu0 0
      %574 = vmatpush.bf16.msra.mxu0 %v562
      %575 = vmatpush.bf16.msra.mxu0 %v561
      %576 = vmatmul.bf16.gmra.mxu0 %v566
      %v577 = vpop.f32.mrf.mxu0
      %v578 = vadd.f32 %v549, %v577
      %v579 = vpop.f32.mrf.mxu0
      %v580 = vadd.f32 %v551, %v579
      %581 = vdwg.mxu0
      %s582 = scalar_lea.vmem %s3, 16
      %v583 = vld [vmem:[%s582] sm:$0xf]
      %v584 = vld [vmem:[%s582 + $0x4] sm:$0xf]
      %v587 = vunpack.c.l.b16 %v583
      %v588 = vunpack.c.l.b16 %v584
      %v589 = vpack.c.b16 %v588, %v587
      %v591 = vsel %vm469, %v589, 0
      %593 = vmatpush.bf16.msra.mxu0 0
      %594 = vmatpush.bf16.msra.mxu0 0
      %595 = vmatpush.bf16.msra.mxu0 0
      %596 = vmatpush.bf16.msra.mxu0 0
      %597 = vmatpush.bf16.msra.mxu0 %v461
      %598 = vmatpush.bf16.msra.mxu0 %v460
      %599 = vmatpush.bf16.msra.mxu0 %v459
      %600 = vmatpush.bf16.msra.mxu0 %v458
      %601 = vmatmul.bf16.gmra.mxu0 %v591
      %v602 = vpop.f32.mrf.mxu0
      %v603 = vadd.f32 0.0, %v602
      %v604 = vpop.f32.mrf.mxu0
      %v605 = vadd.f32 0.0, %v604
      %606 = vdwg.mxu0
      %v607 = vpack.c.bf16 %v605, %v603
      %s608 = scalar_lea.vmem %s4, 32
      %v609 = vld [vmem:[%s608] sm:$0xf]
      %v610 = vld [vmem:[%s608 + $0x4] sm:$0xf]
      %v611 = vld [vmem:[%s608 + $0x8] sm:$0xf]
      %v612 = vld [vmem:[%s608 + $0xc] sm:$0xf]
      %v617 = vunpack.c.l.b16 %v609
      %v618 = vunpack.c.l.b16 %v610
      %v619 = vunpack.c.l.b16 %v611
      %v620 = vunpack.c.l.b16 %v612
      %v621 = vpack.c.b16 %v618, %v617
      %v622 = vpack.c.b16 %v620, %v619
      %v626 = vsel %vm535, %v607, 0
      %628 = vmatpush.bf16.msra.mxu0 0
      %629 = vmatpush.bf16.msra.mxu0 0
      %630 = vmatpush.bf16.msra.mxu0 0
      %631 = vmatpush.bf16.msra.mxu0 0
      %632 = vmatpush.bf16.msra.mxu0 0
      %633 = vmatpush.bf16.msra.mxu0 0
      %634 = vmatpush.bf16.msra.mxu0 %v622
      %635 = vmatpush.bf16.msra.mxu0 %v621
      %636 = vmatmul.bf16.gmra.mxu0 %v626
      %v637 = vpop.f32.mrf.mxu0
      %v638 = vadd.f32 0.0, %v637
      %v639 = vpop.f32.mrf.mxu0
      %v640 = vadd.f32 0.0, %v639
      %641 = vdwg.mxu0
      %v642 = vadd.f32 %v578, %v638
      %v643 = vadd.f32 %v580, %v640
      %s644 = scalar_lea.vmem %s3, 24
      %v645 = vld [vmem:[%s644] sm:$0xf]
      %v646 = vld [vmem:[%s644 + $0x4] sm:$0xf]
      %v649 = vunpack.c.l.b16 %v645
      %v650 = vunpack.c.l.b16 %v646
      %v651 = vpack.c.b16 %v650, %v649
      %v653 = vsel %vm469, %v651, 0
      %655 = vmatpush.bf16.msra.mxu0 0
      %656 = vmatpush.bf16.msra.mxu0 0
      %657 = vmatpush.bf16.msra.mxu0 0
      %658 = vmatpush.bf16.msra.mxu0 0
      %659 = vmatpush.bf16.msra.mxu0 %v461
      %660 = vmatpush.bf16.msra.mxu0 %v460
      %661 = vmatpush.bf16.msra.mxu0 %v459
      %662 = vmatpush.bf16.msra.mxu0 %v458
      %663 = vmatmul.bf16.gmra.mxu0 %v653
      %v664 = vpop.f32.mrf.mxu0
      %v665 = vadd.f32 0.0, %v664
      %v666 = vpop.f32.mrf.mxu0
      %v667 = vadd.f32 0.0, %v666
      %668 = vdwg.mxu0
      %v669 = vpack.c.bf16 %v667, %v665
      %s670 = scalar_lea.vmem %s4, 48
      %v671 = vld [vmem:[%s670] sm:$0xf]
      %v672 = vld [vmem:[%s670 + $0x4] sm:$0xf]
      %v673 = vld [vmem:[%s670 + $0x8] sm:$0xf]
      %v674 = vld [vmem:[%s670 + $0xc] sm:$0xf]
      %v679 = vunpack.c.l.b16 %v671
      %v680 = vunpack.c.l.b16 %v672
      %v681 = vunpack.c.l.b16 %v673
      %v682 = vunpack.c.l.b16 %v674
      %v683 = vpack.c.b16 %v680, %v679
      %v684 = vpack.c.b16 %v682, %v681
      %v688 = vsel %vm535, %v669, 0
      %690 = vmatpush.bf16.msra.mxu0 0
      %691 = vmatpush.bf16.msra.mxu0 0
      %692 = vmatpush.bf16.msra.mxu0 0
      %693 = vmatpush.bf16.msra.mxu0 0
      %694 = vmatpush.bf16.msra.mxu0 0
      %695 = vmatpush.bf16.msra.mxu0 0
      %696 = vmatpush.bf16.msra.mxu0 %v684
      %697 = vmatpush.bf16.msra.mxu0 %v683
      %698 = vmatmul.bf16.gmra.mxu0 %v688
      %v699 = vpop.f32.mrf.mxu0
      %v700 = vadd.f32 0.0, %v699
      %v701 = vpop.f32.mrf.mxu0
      %v702 = vadd.f32 0.0, %v701
      %703 = vdwg.mxu0
      %v704 = vadd.f32 %v642, %v700
      %v705 = vadd.f32 %v643, %v702
      %s706 = scalar_lea.vmem %s3, 32
      %v707 = vld [vmem:[%s706] sm:$0xf]
      %v708 = vld [vmem:[%s706 + $0x4] sm:$0xf]
      %v711 = vunpack.c.l.b16 %v707
      %v712 = vunpack.c.l.b16 %v708
      %v713 = vpack.c.b16 %v712, %v711
      %v715 = vsel %vm469, %v713, 0
      %717 = vmatpush.bf16.msra.mxu0 0
      %718 = vmatpush.bf16.msra.mxu0 0
      %719 = vmatpush.bf16.msra.mxu0 0
      %720 = vmatpush.bf16.msra.mxu0 0
      %721 = vmatpush.bf16.msra.mxu0 %v461
      %722 = vmatpush.bf16.msra.mxu0 %v460
      %723 = vmatpush.bf16.msra.mxu0 %v459
      %724 = vmatpush.bf16.msra.mxu0 %v458
      %725 = vmatmul.bf16.gmra.mxu0 %v715
      %v726 = vpop.f32.mrf.mxu0
      %v727 = vadd.f32 0.0, %v726
      %v728 = vpop.f32.mrf.mxu0
      %v729 = vadd.f32 0.0, %v728
      %730 = vdwg.mxu0
      %v731 = vpack.c.bf16 %v729, %v727
      %s732 = scalar_lea.vmem %s4, 64
      %v733 = vld [vmem:[%s732] sm:$0xf]
      %v734 = vld [vmem:[%s732 + $0x4] sm:$0xf]
      %v735 = vld [vmem:[%s732 + $0x8] sm:$0xf]
      %v736 = vld [vmem:[%s732 + $0xc] sm:$0xf]
      %v741 = vunpack.c.l.b16 %v733
      %v742 = vunpack.c.l.b16 %v734
      %v743 = vunpack.c.l.b16 %v735
      %v744 = vunpack.c.l.b16 %v736
      %v745 = vpack.c.b16 %v742, %v741
      %v746 = vpack.c.b16 %v744, %v743
      %v750 = vsel %vm535, %v731, 0
      %752 = vmatpush.bf16.msra.mxu0 0
      %753 = vmatpush.bf16.msra.mxu0 0
      %754 = vmatpush.bf16.msra.mxu0 0
      %755 = vmatpush.bf16.msra.mxu0 0
      %756 = vmatpush.bf16.msra.mxu0 0
      %757 = vmatpush.bf16.msra.mxu0 0
      %758 = vmatpush.bf16.msra.mxu0 %v746
      %759 = vmatpush.bf16.msra.mxu0 %v745
      %760 = vmatmul.bf16.gmra.mxu0 %v750
      %v761 = vpop.f32.mrf.mxu0
      %v762 = vadd.f32 0.0, %v761
      %v763 = vpop.f32.mrf.mxu0
      %v764 = vadd.f32 0.0, %v763
      %765 = vdwg.mxu0
      %v766 = vadd.f32 %v704, %v762
      %v767 = vadd.f32 %v705, %v764
      %s768 = scalar_lea.vmem %s3, 40
      %v769 = vld [vmem:[%s768] sm:$0xf]
      %v770 = vld [vmem:[%s768 + $0x4] sm:$0xf]
      %v773 = vunpack.c.l.b16 %v769
      %v774 = vunpack.c.l.b16 %v770
      %v775 = vpack.c.b16 %v774, %v773
      %v777 = vsel %vm469, %v775, 0
      %779 = vmatpush.bf16.msra.mxu0 0
      %780 = vmatpush.bf16.msra.mxu0 0
      %781 = vmatpush.bf16.msra.mxu0 0
      %782 = vmatpush.bf16.msra.mxu0 0
      %783 = vmatpush.bf16.msra.mxu0 %v461
      %784 = vmatpush.bf16.msra.mxu0 %v460
      %785 = vmatpush.bf16.msra.mxu0 %v459
      %786 = vmatpush.bf16.msra.mxu0 %v458
      %787 = vmatmul.bf16.gmra.mxu0 %v777
      %v788 = vpop.f32.mrf.mxu0
      %v789 = vadd.f32 0.0, %v788
      %v790 = vpop.f32.mrf.mxu0
      %v791 = vadd.f32 0.0, %v790
      %792 = vdwg.mxu0
      %v793 = vpack.c.bf16 %v791, %v789
      %s794 = scalar_lea.vmem %s4, 80
      %v795 = vld [vmem:[%s794] sm:$0xf]
      %v796 = vld [vmem:[%s794 + $0x4] sm:$0xf]
      %v797 = vld [vmem:[%s794 + $0x8] sm:$0xf]
      %v798 = vld [vmem:[%s794 + $0xc] sm:$0xf]
      %v803 = vunpack.c.l.b16 %v795
      %v804 = vunpack.c.l.b16 %v796
      %v805 = vunpack.c.l.b16 %v797
      %v806 = vunpack.c.l.b16 %v798
      %v807 = vpack.c.b16 %v804, %v803
      %v808 = vpack.c.b16 %v806, %v805
      %v812 = vsel %vm535, %v793, 0
      %814 = vmatpush.bf16.msra.mxu0 0
      %815 = vmatpush.bf16.msra.mxu0 0
      %816 = vmatpush.bf16.msra.mxu0 0
      %817 = vmatpush.bf16.msra.mxu0 0
      %818 = vmatpush.bf16.msra.mxu0 0
      %819 = vmatpush.bf16.msra.mxu0 0
      %820 = vmatpush.bf16.msra.mxu0 %v808
      %821 = vmatpush.bf16.msra.mxu0 %v807
      %822 = vmatmul.bf16.gmra.mxu0 %v812
      %v823 = vpop.f32.mrf.mxu0
      %v824 = vadd.f32 0.0, %v823
      %v825 = vpop.f32.mrf.mxu0
      %v826 = vadd.f32 0.0, %v825
      %827 = vdwg.mxu0
      %v828 = vadd.f32 %v766, %v824
      %v829 = vadd.f32 %v767, %v826
      %s830 = scalar_lea.vmem %s3, 48
      %v831 = vld [vmem:[%s830] sm:$0xf]
      %v832 = vld [vmem:[%s830 + $0x4] sm:$0xf]
      %v835 = vunpack.c.l.b16 %v831
      %v836 = vunpack.c.l.b16 %v832
      %v837 = vpack.c.b16 %v836, %v835
      %v839 = vsel %vm469, %v837, 0
      %841 = vmatpush.bf16.msra.mxu0 0
      %842 = vmatpush.bf16.msra.mxu0 0
      %843 = vmatpush.bf16.msra.mxu0 0
      %844 = vmatpush.bf16.msra.mxu0 0
      %845 = vmatpush.bf16.msra.mxu0 %v461
      %846 = vmatpush.bf16.msra.mxu0 %v460
      %847 = vmatpush.bf16.msra.mxu0 %v459
      %848 = vmatpush.bf16.msra.mxu0 %v458
      %849 = vmatmul.bf16.gmra.mxu0 %v839
      %v850 = vpop.f32.mrf.mxu0
      %v851 = vadd.f32 0.0, %v850
      %v852 = vpop.f32.mrf.mxu0
      %v853 = vadd.f32 0.0, %v852
      %854 = vdwg.mxu0
      %v855 = vpack.c.bf16 %v853, %v851
      %s856 = scalar_lea.vmem %s4, 96
      %v857 = vld [vmem:[%s856] sm:$0xf]
      %v858 = vld [vmem:[%s856 + $0x4] sm:$0xf]
      %v859 = vld [vmem:[%s856 + $0x8] sm:$0xf]
      %v860 = vld [vmem:[%s856 + $0xc] sm:$0xf]
      %v865 = vunpack.c.l.b16 %v857
      %v866 = vunpack.c.l.b16 %v858
      %v867 = vunpack.c.l.b16 %v859
      %v868 = vunpack.c.l.b16 %v860
      %v869 = vpack.c.b16 %v866, %v865
      %v870 = vpack.c.b16 %v868, %v867
      %v874 = vsel %vm535, %v855, 0
      %876 = vmatpush.bf16.msra.mxu0 0
      %877 = vmatpush.bf16.msra.mxu0 0
      %878 = vmatpush.bf16.msra.mxu0 0
      %879 = vmatpush.bf16.msra.mxu0 0
      %880 = vmatpush.bf16.msra.mxu0 0
      %881 = vmatpush.bf16.msra.mxu0 0
      %882 = vmatpush.bf16.msra.mxu0 %v870
      %883 = vmatpush.bf16.msra.mxu0 %v869
      %884 = vmatmul.bf16.gmra.mxu0 %v874
      %v885 = vpop.f32.mrf.mxu0
      %v886 = vadd.f32 0.0, %v885
      %v887 = vpop.f32.mrf.mxu0
      %v888 = vadd.f32 0.0, %v887
      %889 = vdwg.mxu0
      %v890 = vadd.f32 %v828, %v886
      %v891 = vadd.f32 %v829, %v888
      %s892 = scalar_lea.vmem %s3, 56
      %v893 = vld [vmem:[%s892] sm:$0xf]
      %v894 = vld [vmem:[%s892 + $0x4] sm:$0xf]
      %v897 = vunpack.c.l.b16 %v893
      %v898 = vunpack.c.l.b16 %v894
      %v899 = vpack.c.b16 %v898, %v897
      %v901 = vsel %vm469, %v899, 0
      %903 = vmatpush.bf16.msra.mxu0 0
      %904 = vmatpush.bf16.msra.mxu0 0
      %905 = vmatpush.bf16.msra.mxu0 0
      %906 = vmatpush.bf16.msra.mxu0 0
      %907 = vmatpush.bf16.msra.mxu0 %v461
      %908 = vmatpush.bf16.msra.mxu0 %v460
      %909 = vmatpush.bf16.msra.mxu0 %v459
      %910 = vmatpush.bf16.msra.mxu0 %v458
      %911 = vmatmul.bf16.gmra.mxu0 %v901
      %v912 = vpop.f32.mrf.mxu0
      %v913 = vadd.f32 0.0, %v912
      %v914 = vpop.f32.mrf.mxu0
      %v915 = vadd.f32 0.0, %v914
      %916 = vdwg.mxu0
      %v917 = vpack.c.bf16 %v915, %v913
      %s918 = scalar_lea.vmem %s4, 112
      %v919 = vld [vmem:[%s918] sm:$0xf]
      %v920 = vld [vmem:[%s918 + $0x4] sm:$0xf]
      %v921 = vld [vmem:[%s918 + $0x8] sm:$0xf]
      %v922 = vld [vmem:[%s918 + $0xc] sm:$0xf]
      %v927 = vunpack.c.l.b16 %v919
      %v928 = vunpack.c.l.b16 %v920
      %v929 = vunpack.c.l.b16 %v921
      %v930 = vunpack.c.l.b16 %v922
      %v931 = vpack.c.b16 %v928, %v927
      %v932 = vpack.c.b16 %v930, %v929
      %v936 = vsel %vm535, %v917, 0
      %938 = vmatpush.bf16.msra.mxu0 0
      %939 = vmatpush.bf16.msra.mxu0 0
      %940 = vmatpush.bf16.msra.mxu0 0
      %941 = vmatpush.bf16.msra.mxu0 0
      %942 = vmatpush.bf16.msra.mxu0 0
      %943 = vmatpush.bf16.msra.mxu0 0
      %944 = vmatpush.bf16.msra.mxu0 %v932
      %945 = vmatpush.bf16.msra.mxu0 %v931
      %946 = vmatmul.bf16.gmra.mxu0 %v936
      %v947 = vpop.f32.mrf.mxu0
      %v948 = vadd.f32 0.0, %v947
      %v949 = vpop.f32.mrf.mxu0
      %v950 = vadd.f32 0.0, %v949
      %951 = vdwg.mxu0
      %v952 = vadd.f32 %v890, %v948
      %v953 = vadd.f32 %v891, %v950
      %s954 = scalar_lea.vmem %s3, 64
      %v955 = vld [vmem:[%s954] sm:$0xf]
      %v956 = vld [vmem:[%s954 + $0x4] sm:$0xf]
      %v959 = vunpack.c.l.b16 %v955
      %v960 = vunpack.c.l.b16 %v956
      %v961 = vpack.c.b16 %v960, %v959
      %v963 = vsel %vm469, %v961, 0
      %965 = vmatpush.bf16.msra.mxu0 0
      %966 = vmatpush.bf16.msra.mxu0 0
      %967 = vmatpush.bf16.msra.mxu0 0
      %968 = vmatpush.bf16.msra.mxu0 0
      %969 = vmatpush.bf16.msra.mxu0 %v461
      %970 = vmatpush.bf16.msra.mxu0 %v460
      %971 = vmatpush.bf16.msra.mxu0 %v459
      %972 = vmatpush.bf16.msra.mxu0 %v458
      %973 = vmatmul.bf16.gmra.mxu0 %v963
      %v974 = vpop.f32.mrf.mxu0
      %v975 = vadd.f32 0.0, %v974
      %v976 = vpop.f32.mrf.mxu0
      %v977 = vadd.f32 0.0, %v976
      %978 = vdwg.mxu0
      %v979 = vpack.c.bf16 %v977, %v975
      %s980 = scalar_lea.vmem %s4, 128
      %v981 = vld [vmem:[%s980] sm:$0xf]
      %v982 = vld [vmem:[%s980 + $0x4] sm:$0xf]
      %v983 = vld [vmem:[%s980 + $0x8] sm:$0xf]
      %v984 = vld [vmem:[%s980 + $0xc] sm:$0xf]
      %v989 = vunpack.c.l.b16 %v981
      %v990 = vunpack.c.l.b16 %v982
      %v991 = vunpack.c.l.b16 %v983
      %v992 = vunpack.c.l.b16 %v984
      %v993 = vpack.c.b16 %v990, %v989
      %v994 = vpack.c.b16 %v992, %v991
      %v998 = vsel %vm535, %v979, 0
      %1000 = vmatpush.bf16.msra.mxu0 0
      %1001 = vmatpush.bf16.msra.mxu0 0
      %1002 = vmatpush.bf16.msra.mxu0 0
      %1003 = vmatpush.bf16.msra.mxu0 0
      %1004 = vmatpush.bf16.msra.mxu0 0
      %1005 = vmatpush.bf16.msra.mxu0 0
      %1006 = vmatpush.bf16.msra.mxu0 %v994
      %1007 = vmatpush.bf16.msra.mxu0 %v993
      %1008 = vmatmul.bf16.gmra.mxu0 %v998
      %v1009 = vpop.f32.mrf.mxu0
      %v1010 = vadd.f32 0.0, %v1009
      %v1011 = vpop.f32.mrf.mxu0
      %v1012 = vadd.f32 0.0, %v1011
      %1013 = vdwg.mxu0
      %v1014 = vadd.f32 %v952, %v1010
      %v1015 = vadd.f32 %v953, %v1012
      %s1016 = scalar_lea.vmem %s3, 72
      %v1017 = vld [vmem:[%s1016] sm:$0xf]
      %v1018 = vld [vmem:[%s1016 + $0x4] sm:$0xf]
      %v1021 = vunpack.c.l.b16 %v1017
      %v1022 = vunpack.c.l.b16 %v1018
      %v1023 = vpack.c.b16 %v1022, %v1021
      %v1025 = vsel %vm469, %v1023, 0
      %1027 = vmatpush.bf16.msra.mxu0 0
      %1028 = vmatpush.bf16.msra.mxu0 0
      %1029 = vmatpush.bf16.msra.mxu0 0
      %1030 = vmatpush.bf16.msra.mxu0 0
      %1031 = vmatpush.bf16.msra.mxu0 %v461
      %1032 = vmatpush.bf16.msra.mxu0 %v460
      %1033 = vmatpush.bf16.msra.mxu0 %v459
      %1034 = vmatpush.bf16.msra.mxu0 %v458
      %1035 = vmatmul.bf16.gmra.mxu0 %v1025
      %v1036 = vpop.f32.mrf.mxu0
      %v1037 = vadd.f32 0.0, %v1036
      %v1038 = vpop.f32.mrf.mxu0
      %v1039 = vadd.f32 0.0, %v1038
      %1040 = vdwg.mxu0
      %v1041 = vpack.c.bf16 %v1039, %v1037
      %s1042 = scalar_lea.vmem %s4, 144
      %v1043 = vld [vmem:[%s1042] sm:$0xf]
      %v1044 = vld [vmem:[%s1042 + $0x4] sm:$0xf]
      %v1045 = vld [vmem:[%s1042 + $0x8] sm:$0xf]
      %v1046 = vld [vmem:[%s1042 + $0xc] sm:$0xf]
      %v1051 = vunpack.c.l.b16 %v1043
      %v1052 = vunpack.c.l.b16 %v1044
      %v1053 = vunpack.c.l.b16 %v1045
      %v1054 = vunpack.c.l.b16 %v1046
      %v1055 = vpack.c.b16 %v1052, %v1051
      %v1056 = vpack.c.b16 %v1054, %v1053
      %v1060 = vsel %vm535, %v1041, 0
      %1062 = vmatpush.bf16.msra.mxu0 0
      %1063 = vmatpush.bf16.msra.mxu0 0
      %1064 = vmatpush.bf16.msra.mxu0 0
      %1065 = vmatpush.bf16.msra.mxu0 0
      %1066 = vmatpush.bf16.msra.mxu0 0
      %1067 = vmatpush.bf16.msra.mxu0 0
      %1068 = vmatpush.bf16.msra.mxu0 %v1056
      %1069 = vmatpush.bf16.msra.mxu0 %v1055
      %1070 = vmatmul.bf16.gmra.mxu0 %v1060
      %v1071 = vpop.f32.mrf.mxu0
      %v1072 = vadd.f32 0.0, %v1071
      %v1073 = vpop.f32.mrf.mxu0
      %v1074 = vadd.f32 0.0, %v1073
      %1075 = vdwg.mxu0
      %v1076 = vadd.f32 %v1014, %v1072
      %v1077 = vadd.f32 %v1015, %v1074
      %s1078 = scalar_lea.vmem %s3, 80
      %v1079 = vld [vmem:[%s1078] sm:$0xf]
      %v1080 = vld [vmem:[%s1078 + $0x4] sm:$0xf]
      %v1083 = vunpack.c.l.b16 %v1079
      %v1084 = vunpack.c.l.b16 %v1080
      %v1085 = vpack.c.b16 %v1084, %v1083
      %v1087 = vsel %vm469, %v1085, 0
      %1089 = vmatpush.bf16.msra.mxu0 0
      %1090 = vmatpush.bf16.msra.mxu0 0
      %1091 = vmatpush.bf16.msra.mxu0 0
      %1092 = vmatpush.bf16.msra.mxu0 0
      %1093 = vmatpush.bf16.msra.mxu0 %v461
      %1094 = vmatpush.bf16.msra.mxu0 %v460
      %1095 = vmatpush.bf16.msra.mxu0 %v459
      %1096 = vmatpush.bf16.msra.mxu0 %v458
      %1097 = vmatmul.bf16.gmra.mxu0 %v1087
      %v1098 = vpop.f32.mrf.mxu0
      %v1099 = vadd.f32 0.0, %v1098
      %v1100 = vpop.f32.mrf.mxu0
      %v1101 = vadd.f32 0.0, %v1100
      %1102 = vdwg.mxu0
      %v1103 = vpack.c.bf16 %v1101, %v1099
      %s1104 = scalar_lea.vmem %s4, 160
      %v1105 = vld [vmem:[%s1104] sm:$0xf]
      %v1106 = vld [vmem:[%s1104 + $0x4] sm:$0xf]
      %v1107 = vld [vmem:[%s1104 + $0x8] sm:$0xf]
      %v1108 = vld [vmem:[%s1104 + $0xc] sm:$0xf]
      %v1113 = vunpack.c.l.b16 %v1105
      %v1114 = vunpack.c.l.b16 %v1106
      %v1115 = vunpack.c.l.b16 %v1107
      %v1116 = vunpack.c.l.b16 %v1108
      %v1117 = vpack.c.b16 %v1114, %v1113
      %v1118 = vpack.c.b16 %v1116, %v1115
      %v1122 = vsel %vm535, %v1103, 0
      %1124 = vmatpush.bf16.msra.mxu0 0
      %1125 = vmatpush.bf16.msra.mxu0 0
      %1126 = vmatpush.bf16.msra.mxu0 0
      %1127 = vmatpush.bf16.msra.mxu0 0
      %1128 = vmatpush.bf16.msra.mxu0 0
      %1129 = vmatpush.bf16.msra.mxu0 0
      %1130 = vmatpush.bf16.msra.mxu0 %v1118
      %1131 = vmatpush.bf16.msra.mxu0 %v1117
      %1132 = vmatmul.bf16.gmra.mxu0 %v1122
      %v1133 = vpop.f32.mrf.mxu0
      %v1134 = vadd.f32 0.0, %v1133
      %v1135 = vpop.f32.mrf.mxu0
      %v1136 = vadd.f32 0.0, %v1135
      %1137 = vdwg.mxu0
      %v1138 = vadd.f32 %v1076, %v1134
      %v1139 = vadd.f32 %v1077, %v1136
      %s1140 = scalar_lea.vmem %s3, 88
      %v1141 = vld [vmem:[%s1140] sm:$0xf]
      %v1142 = vld [vmem:[%s1140 + $0x4] sm:$0xf]
      %v1145 = vunpack.c.l.b16 %v1141
      %v1146 = vunpack.c.l.b16 %v1142
      %v1147 = vpack.c.b16 %v1146, %v1145
      %v1149 = vsel %vm469, %v1147, 0
      %1151 = vmatpush.bf16.msra.mxu0 0
      %1152 = vmatpush.bf16.msra.mxu0 0
      %1153 = vmatpush.bf16.msra.mxu0 0
      %1154 = vmatpush.bf16.msra.mxu0 0
      %1155 = vmatpush.bf16.msra.mxu0 %v461
      %1156 = vmatpush.bf16.msra.mxu0 %v460
      %1157 = vmatpush.bf16.msra.mxu0 %v459
      %1158 = vmatpush.bf16.msra.mxu0 %v458
      %1159 = vmatmul.bf16.gmra.mxu0 %v1149
      %v1160 = vpop.f32.mrf.mxu0
      %v1161 = vadd.f32 0.0, %v1160
      %v1162 = vpop.f32.mrf.mxu0
      %v1163 = vadd.f32 0.0, %v1162
      %1164 = vdwg.mxu0
      %v1165 = vpack.c.bf16 %v1163, %v1161
      %s1166 = scalar_lea.vmem %s4, 176
      %v1167 = vld [vmem:[%s1166] sm:$0xf]
      %v1168 = vld [vmem:[%s1166 + $0x4] sm:$0xf]
      %v1169 = vld [vmem:[%s1166 + $0x8] sm:$0xf]
      %v1170 = vld [vmem:[%s1166 + $0xc] sm:$0xf]
      %v1175 = vunpack.c.l.b16 %v1167
      %v1176 = vunpack.c.l.b16 %v1168
      %v1177 = vunpack.c.l.b16 %v1169
      %v1178 = vunpack.c.l.b16 %v1170
      %v1179 = vpack.c.b16 %v1176, %v1175
      %v1180 = vpack.c.b16 %v1178, %v1177
      %v1184 = vsel %vm535, %v1165, 0
      %1186 = vmatpush.bf16.msra.mxu0 0
      %1187 = vmatpush.bf16.msra.mxu0 0
      %1188 = vmatpush.bf16.msra.mxu0 0
      %1189 = vmatpush.bf16.msra.mxu0 0
      %1190 = vmatpush.bf16.msra.mxu0 0
      %1191 = vmatpush.bf16.msra.mxu0 0
      %1192 = vmatpush.bf16.msra.mxu0 %v1180
      %1193 = vmatpush.bf16.msra.mxu0 %v1179
      %1194 = vmatmul.bf16.gmra.mxu0 %v1184
      %v1195 = vpop.f32.mrf.mxu0
      %v1196 = vadd.f32 0.0, %v1195
      %v1197 = vpop.f32.mrf.mxu0
      %v1198 = vadd.f32 0.0, %v1197
      %1199 = vdwg.mxu0
      %v1200 = vadd.f32 %v1138, %v1196
      %v1201 = vadd.f32 %v1139, %v1198
      %s1202 = scalar_lea.vmem %s3, 96
      %v1203 = vld [vmem:[%s1202] sm:$0xf]
      %v1204 = vld [vmem:[%s1202 + $0x4] sm:$0xf]
      %v1207 = vunpack.c.l.b16 %v1203
      %v1208 = vunpack.c.l.b16 %v1204
      %v1209 = vpack.c.b16 %v1208, %v1207
      %v1211 = vsel %vm469, %v1209, 0
      %1213 = vmatpush.bf16.msra.mxu0 0
      %1214 = vmatpush.bf16.msra.mxu0 0
      %1215 = vmatpush.bf16.msra.mxu0 0
      %1216 = vmatpush.bf16.msra.mxu0 0
      %1217 = vmatpush.bf16.msra.mxu0 %v461
      %1218 = vmatpush.bf16.msra.mxu0 %v460
      %1219 = vmatpush.bf16.msra.mxu0 %v459
      %1220 = vmatpush.bf16.msra.mxu0 %v458
      %1221 = vmatmul.bf16.gmra.mxu0 %v1211
      %v1222 = vpop.f32.mrf.mxu0
      %v1223 = vadd.f32 0.0, %v1222
      %v1224 = vpop.f32.mrf.mxu0
      %v1225 = vadd.f32 0.0, %v1224
      %1226 = vdwg.mxu0
      %v1227 = vpack.c.bf16 %v1225, %v1223
      %s1228 = scalar_lea.vmem %s4, 192
      %v1229 = vld [vmem:[%s1228] sm:$0xf]
      %v1230 = vld [vmem:[%s1228 + $0x4] sm:$0xf]
      %v1231 = vld [vmem:[%s1228 + $0x8] sm:$0xf]
      %v1232 = vld [vmem:[%s1228 + $0xc] sm:$0xf]
      %v1237 = vunpack.c.l.b16 %v1229
      %v1238 = vunpack.c.l.b16 %v1230
      %v1239 = vunpack.c.l.b16 %v1231
      %v1240 = vunpack.c.l.b16 %v1232
      %v1241 = vpack.c.b16 %v1238, %v1237
      %v1242 = vpack.c.b16 %v1240, %v1239
      %v1246 = vsel %vm535, %v1227, 0
      %1248 = vmatpush.bf16.msra.mxu0 0
      %1249 = vmatpush.bf16.msra.mxu0 0
      %1250 = vmatpush.bf16.msra.mxu0 0
      %1251 = vmatpush.bf16.msra.mxu0 0
      %1252 = vmatpush.bf16.msra.mxu0 0
      %1253 = vmatpush.bf16.msra.mxu0 0
      %1254 = vmatpush.bf16.msra.mxu0 %v1242
      %1255 = vmatpush.bf16.msra.mxu0 %v1241
      %1256 = vmatmul.bf16.gmra.mxu0 %v1246
      %v1257 = vpop.f32.mrf.mxu0
      %v1258 = vadd.f32 0.0, %v1257
      %v1259 = vpop.f32.mrf.mxu0
      %v1260 = vadd.f32 0.0, %v1259
      %1261 = vdwg.mxu0
      %v1262 = vadd.f32 %v1200, %v1258
      %v1263 = vadd.f32 %v1201, %v1260
      %s1264 = scalar_lea.vmem %s3, 104
      %v1265 = vld [vmem:[%s1264] sm:$0xf]
      %v1266 = vld [vmem:[%s1264 + $0x4] sm:$0xf]
      %v1269 = vunpack.c.l.b16 %v1265
      %v1270 = vunpack.c.l.b16 %v1266
      %v1271 = vpack.c.b16 %v1270, %v1269
      %v1273 = vsel %vm469, %v1271, 0
      %1275 = vmatpush.bf16.msra.mxu0 0
      %1276 = vmatpush.bf16.msra.mxu0 0
      %1277 = vmatpush.bf16.msra.mxu0 0
      %1278 = vmatpush.bf16.msra.mxu0 0
      %1279 = vmatpush.bf16.msra.mxu0 %v461
      %1280 = vmatpush.bf16.msra.mxu0 %v460
      %1281 = vmatpush.bf16.msra.mxu0 %v459
      %1282 = vmatpush.bf16.msra.mxu0 %v458
      %1283 = vmatmul.bf16.gmra.mxu0 %v1273
      %v1284 = vpop.f32.mrf.mxu0
      %v1285 = vadd.f32 0.0, %v1284
      %v1286 = vpop.f32.mrf.mxu0
      %v1287 = vadd.f32 0.0, %v1286
      %1288 = vdwg.mxu0
      %v1289 = vpack.c.bf16 %v1287, %v1285
      %s1290 = scalar_lea.vmem %s4, 208
      %v1291 = vld [vmem:[%s1290] sm:$0xf]
      %v1292 = vld [vmem:[%s1290 + $0x4] sm:$0xf]
      %v1293 = vld [vmem:[%s1290 + $0x8] sm:$0xf]
      %v1294 = vld [vmem:[%s1290 + $0xc] sm:$0xf]
      %v1299 = vunpack.c.l.b16 %v1291
      %v1300 = vunpack.c.l.b16 %v1292
      %v1301 = vunpack.c.l.b16 %v1293
      %v1302 = vunpack.c.l.b16 %v1294
      %v1303 = vpack.c.b16 %v1300, %v1299
      %v1304 = vpack.c.b16 %v1302, %v1301
      %v1308 = vsel %vm535, %v1289, 0
      %1310 = vmatpush.bf16.msra.mxu0 0
      %1311 = vmatpush.bf16.msra.mxu0 0
      %1312 = vmatpush.bf16.msra.mxu0 0
      %1313 = vmatpush.bf16.msra.mxu0 0
      %1314 = vmatpush.bf16.msra.mxu0 0
      %1315 = vmatpush.bf16.msra.mxu0 0
      %1316 = vmatpush.bf16.msra.mxu0 %v1304
      %1317 = vmatpush.bf16.msra.mxu0 %v1303
      %1318 = vmatmul.bf16.gmra.mxu0 %v1308
      %v1319 = vpop.f32.mrf.mxu0
      %v1320 = vadd.f32 0.0, %v1319
      %v1321 = vpop.f32.mrf.mxu0
      %v1322 = vadd.f32 0.0, %v1321
      %1323 = vdwg.mxu0
      %v1324 = vadd.f32 %v1262, %v1320
      %v1325 = vadd.f32 %v1263, %v1322
      %s1326 = scalar_lea.vmem %s3, 112
      %v1327 = vld [vmem:[%s1326] sm:$0xf]
      %v1328 = vld [vmem:[%s1326 + $0x4] sm:$0xf]
      %v1331 = vunpack.c.l.b16 %v1327
      %v1332 = vunpack.c.l.b16 %v1328
      %v1333 = vpack.c.b16 %v1332, %v1331
      %v1335 = vsel %vm469, %v1333, 0
      %1337 = vmatpush.bf16.msra.mxu0 0
      %1338 = vmatpush.bf16.msra.mxu0 0
      %1339 = vmatpush.bf16.msra.mxu0 0
      %1340 = vmatpush.bf16.msra.mxu0 0
      %1341 = vmatpush.bf16.msra.mxu0 %v461
      %1342 = vmatpush.bf16.msra.mxu0 %v460
      %1343 = vmatpush.bf16.msra.mxu0 %v459
      %1344 = vmatpush.bf16.msra.mxu0 %v458
      %1345 = vmatmul.bf16.gmra.mxu0 %v1335
      %v1346 = vpop.f32.mrf.mxu0
      %v1347 = vadd.f32 0.0, %v1346
      %v1348 = vpop.f32.mrf.mxu0
      %v1349 = vadd.f32 0.0, %v1348
      %1350 = vdwg.mxu0
      %v1351 = vpack.c.bf16 %v1349, %v1347
      %s1352 = scalar_lea.vmem %s4, 224
      %v1353 = vld [vmem:[%s1352] sm:$0xf]
      %v1354 = vld [vmem:[%s1352 + $0x4] sm:$0xf]
      %v1355 = vld [vmem:[%s1352 + $0x8] sm:$0xf]
      %v1356 = vld [vmem:[%s1352 + $0xc] sm:$0xf]
      %v1361 = vunpack.c.l.b16 %v1353
      %v1362 = vunpack.c.l.b16 %v1354
      %v1363 = vunpack.c.l.b16 %v1355
      %v1364 = vunpack.c.l.b16 %v1356
      %v1365 = vpack.c.b16 %v1362, %v1361
      %v1366 = vpack.c.b16 %v1364, %v1363
      %v1370 = vsel %vm535, %v1351, 0
      %1372 = vmatpush.bf16.msra.mxu0 0
      %1373 = vmatpush.bf16.msra.mxu0 0
      %1374 = vmatpush.bf16.msra.mxu0 0
      %1375 = vmatpush.bf16.msra.mxu0 0
      %1376 = vmatpush.bf16.msra.mxu0 0
      %1377 = vmatpush.bf16.msra.mxu0 0
      %1378 = vmatpush.bf16.msra.mxu0 %v1366
      %1379 = vmatpush.bf16.msra.mxu0 %v1365
      %1380 = vmatmul.bf16.gmra.mxu0 %v1370
      %v1381 = vpop.f32.mrf.mxu0
      %v1382 = vadd.f32 0.0, %v1381
      %v1383 = vpop.f32.mrf.mxu0
      %v1384 = vadd.f32 0.0, %v1383
      %1385 = vdwg.mxu0
      %v1386 = vadd.f32 %v1324, %v1382
      %v1387 = vadd.f32 %v1325, %v1384
      %s1388 = scalar_lea.vmem %s3, 120
      %v1389 = vld [vmem:[%s1388] sm:$0xf]
      %v1390 = vld [vmem:[%s1388 + $0x4] sm:$0xf]
      %v1393 = vunpack.c.l.b16 %v1389
      %v1394 = vunpack.c.l.b16 %v1390
      %v1395 = vpack.c.b16 %v1394, %v1393
      %v1397 = vsel %vm469, %v1395, 0
      %1399 = vmatpush.bf16.msra.mxu0 0
      %1400 = vmatpush.bf16.msra.mxu0 0
      %1401 = vmatpush.bf16.msra.mxu0 0
      %1402 = vmatpush.bf16.msra.mxu0 0
      %1403 = vmatpush.bf16.msra.mxu0 %v461
      %1404 = vmatpush.bf16.msra.mxu0 %v460
      %1405 = vmatpush.bf16.msra.mxu0 %v459
      %1406 = vmatpush.bf16.msra.mxu0 %v458
      %1407 = vmatmul.bf16.gmra.mxu0 %v1397
      %v1408 = vpop.f32.mrf.mxu0
      %v1409 = vadd.f32 0.0, %v1408
      %v1410 = vpop.f32.mrf.mxu0
      %v1411 = vadd.f32 0.0, %v1410
      %1412 = vdwg.mxu0
      %v1413 = vpack.c.bf16 %v1411, %v1409
      %s1414 = scalar_lea.vmem %s4, 240
      %v1415 = vld [vmem:[%s1414] sm:$0xf]
      %v1416 = vld [vmem:[%s1414 + $0x4] sm:$0xf]
      %v1417 = vld [vmem:[%s1414 + $0x8] sm:$0xf]
      %v1418 = vld [vmem:[%s1414 + $0xc] sm:$0xf]
      %v1423 = vunpack.c.l.b16 %v1415
      %v1424 = vunpack.c.l.b16 %v1416
      %v1425 = vunpack.c.l.b16 %v1417
      %v1426 = vunpack.c.l.b16 %v1418
      %v1427 = vpack.c.b16 %v1424, %v1423
      %v1428 = vpack.c.b16 %v1426, %v1425
      %v1432 = vsel %vm535, %v1413, 0
      %1434 = vmatpush.bf16.msra.mxu0 0
      %1435 = vmatpush.bf16.msra.mxu0 0
      %1436 = vmatpush.bf16.msra.mxu0 0
      %1437 = vmatpush.bf16.msra.mxu0 0
      %1438 = vmatpush.bf16.msra.mxu0 0
      %1439 = vmatpush.bf16.msra.mxu0 0
      %1440 = vmatpush.bf16.msra.mxu0 %v1428
      %1441 = vmatpush.bf16.msra.mxu0 %v1427
      %1442 = vmatmul.bf16.gmra.mxu0 %v1432
      %v1443 = vpop.f32.mrf.mxu0
      %v1444 = vadd.f32 0.0, %v1443
      %v1445 = vpop.f32.mrf.mxu0
      %v1446 = vadd.f32 0.0, %v1445
      %1447 = vdwg.mxu0
      %v1448 = vadd.f32 %v1386, %v1444
      %v1449 = vadd.f32 %v1387, %v1446
      %v1450 = vld [vmem:[%s5] sm:$0x1]
      %v1452 = vperm.slane %v1450, 0
      %v1454 = vadd.f32 %v1448, %v1452
      %v1455 = vadd.f32 %v1449, %v1452
      %v1456 = vsel %vm469, %v1454, 0.0
      %v1457 = vsel %vm469, %v1455, 0.0
      %v1458 = vadd.f32 %v1456, %v1457
      %v1459 = vrot.slane %v1458, 4
      %v1460 = vadd.f32 %v1458, %v1459
      %v1461 = vrot.slane %v1460, 2
      %v1462 = vadd.f32 %v1460, %v1461
      %v1463 = vrot.slane %v1462, 1
      %v1464 = vadd.f32 %v1462, %v1463
      %v1465 = vrcp.pop 16.0
      %v1466 = vmul.f32 16.0, %v1465
      %v1467 = vsub.f32 1.0, %v1466
      %v1468 = vmul.f32 %v1465, %v1467
      %v1469 = vadd.f32 %v1465, %v1468
      %vm1470 = vweird.f32 %v1465
      %v1471 = vsel %vm1470, %v1465, %v1469
      %v1472 = vmul.f32 %v1464, %v1471
      %v1473 = vsub.f32 %v1454, %v1472
      %v1474 = vsub.f32 %v1455, %v1472
      %v1475 = vmul.f32 %v1473, %v1473
      %v1476 = vmul.f32 %v1474, %v1474
      %v1477 = vsel %vm469, %v1475, 0.0
      %v1478 = vsel %vm469, %v1476, 0.0
      %v1479 = vadd.f32 %v1477, %v1478
      %v1480 = vrot.slane %v1479, 4
      %v1481 = vadd.f32 %v1479, %v1480
      %v1482 = vrot.slane %v1481, 2
      %v1483 = vadd.f32 %v1481, %v1482
      %v1484 = vrot.slane %v1483, 1
      %v1485 = vadd.f32 %v1483, %v1484
      %v1486 = vmul.f32 %v1485, %v1471
      %v1487 = vadd.f32 %v1486, 1e-05
      %v1488 = vrsqrt.pop %v1487
      %v1489 = vmul.f32 %v1488, %v1487
      %v1490 = vmul.f32 %v1489, %v1488
      %v1491 = vmul.f32 0.5, %v1490
      %v1492 = vsub.f32 1.5, %v1491
      %v1493 = vmul.f32 %v1488, %v1492
      %vm1494 = vweird.f32 %v1487
      %vm1495 = vweird.f32 %v1488
      %vm1496 = vmor %vm1494, %vm1495
      %v1497 = vsel %vm1496, %v1488, %v1493
      %v1498 = vmul.f32 %v1473, %v1497
      %v1499 = vmul.f32 %v1474, %v1497
      %vm1500 = vcmp.gt.f32.partialorder %v1498, 0.0
      %vm1501 = vcmp.gt.f32.partialorder %v1499, 0.0
      %v1502 = vmul.f32 %v1498, 0.2
      %v1503 = vmul.f32 %v1499, 0.2
      %v1504 = vsel %vm1500, %v1498, %v1502
      %v1505 = vsel %vm1501, %v1499, %v1503
      %v1506 = vld [vmem:[%s6] sm:$0xff]
      %v1507 = vld [vmem:[%s6 + $0x8] sm:$0xff]
      %v1508 = vld [vmem:[%s6 + $0x10] sm:$0xff]
      %v1509 = vld [vmem:[%s6 + $0x18] sm:$0x1]
      %vm1510 = vcmask 130048
      %v1512 = vsel %vm1510, %v1506, 0
      %v1515 = vsel %vm1510, %v1507, 0
      %v1518 = vsel %vm1510, %v1508, 0
      %v1521 = vsel %vm1510, %v1509, 0
      %1523 = vmatpush.msra.mxu0 0.0
      %1524 = vmatpush.msra.mxu0 0.0
      %1525 = vmatpush.msra.mxu0 0.0
      %1526 = vmatpush.msra.mxu0 0.0
      %1527 = vmatpush.msra.mxu0 0.0
      %1528 = vmatpush.msra.mxu0 0.0
      %1529 = vmatpush.msra.mxu0 0.0
      %1530 = vmatpush.msra.mxu0 0.0
      %1531 = vmatpush.msra.mxu0 0.0
      %1532 = vmatpush.msra.mxu0 0.0
      %1533 = vmatpush.msra.mxu0 0.0
      %1534 = vmatpush.msra.mxu0 0.0
      %1535 = vmatpush.msra.mxu0 0.0
      %1536 = vmatpush.msra.mxu0 0.0
      %1537 = vmatpush.msra.mxu0 %v1505
      %1538 = vmatpush.msra.mxu0 %v1504
      %1539 = vmatmul.f32.gmra.mxu0 %v1512
      %v1540 = vpop.f32.mrf.mxu0
      %v1541 = vadd.f32 0.0, %v1540
      %1542 = vmatmul.f32.gmra.mxu0 %v1515
      %v1543 = vpop.f32.mrf.mxu0
      %v1544 = vadd.f32 0.0, %v1543
      %1545 = vmatmul.f32.gmra.mxu0 %v1518
      %v1546 = vpop.f32.mrf.mxu0
      %v1547 = vadd.f32 0.0, %v1546
      %1548 = vmatmul.f32.gmra.mxu0 %v1521
      %v1549 = vpop.f32.mrf.mxu0
      %v1550 = vadd.f32 0.0, %v1549
      %1551 = vdwg.mxu0
      %v1552 = vld [vmem:[%s7] sm:$0x1]
      %v1554 = vperm.slane %v1552, 0
      %v1556 = vmul.f32 %v1541, %v1554
      %v1557 = vmul.f32 %v1544, %v1554
      %v1558 = vmul.f32 %v1547, %v1554
      %v1559 = vmul.f32 %v1550, %v1554
      %v1560 = vsel %vm469, %v1556, 0.0
      %1561 = vadd.xlane.f32.xlu0 %v1560
      %v1562 = vpop.xlane.xlu0 %1561
      %v1563 = vsel %vm469, %v1557, 0.0
      %1564 = vadd.xlane.f32.xlu0 %v1563
      %v1565 = vpop.xlane.xlu0 %1564
      %v1566 = vsel %vm469, %v1558, 0.0
      %1567 = vadd.xlane.f32.xlu0 %v1566
      %v1568 = vpop.xlane.xlu0 %1567
      %vm1569 = vcmask 516096
      %v1570 = vsel %vm1569, %v1559, 0.0
      %1571 = vadd.xlane.f32.xlu0 %v1570
      %v1572 = vpop.xlane.xlu0 %1571
      %v1573 = vadd.f32 %v1562, 0.0
      %v1574 = vadd.f32 %v1565, 0.0
      %v1575 = vadd.f32 %v1568, 0.0
      %v1576 = vadd.f32 %v1572, 0.0
      %s1577 = scalar_lea.vmem %s6, 32
      %v1578 = vld [vmem:[%s1577] sm:$0xff]
      %v1579 = vld [vmem:[%s1577 + $0x8] sm:$0xff]
      %v1580 = vld [vmem:[%s1577 + $0x10] sm:$0xff]
      %v1581 = vld [vmem:[%s1577 + $0x18] sm:$0x1]
      %v1583 = vsel %vm1510, %v1578, 0
      %v1586 = vsel %vm1510, %v1579, 0
      %v1589 = vsel %vm1510, %v1580, 0
      %v1592 = vsel %vm1510, %v1581, 0
      %1594 = vmatpush.msra.mxu0 0.0
      %1595 = vmatpush.msra.mxu0 0.0
      %1596 = vmatpush.msra.mxu0 0.0
      %1597 = vmatpush.msra.mxu0 0.0
      %1598 = vmatpush.msra.mxu0 0.0
      %1599 = vmatpush.msra.mxu0 0.0
      %1600 = vmatpush.msra.mxu0 0.0
      %1601 = vmatpush.msra.mxu0 0.0
      %1602 = vmatpush.msra.mxu0 0.0
      %1603 = vmatpush.msra.mxu0 0.0
      %1604 = vmatpush.msra.mxu0 0.0
      %1605 = vmatpush.msra.mxu0 0.0
      %1606 = vmatpush.msra.mxu0 0.0
      %1607 = vmatpush.msra.mxu0 0.0
      %1608 = vmatpush.msra.mxu0 %v1505
      %1609 = vmatpush.msra.mxu0 %v1504
      %1610 = vmatmul.f32.gmra.mxu0 %v1583
      %v1611 = vpop.f32.mrf.mxu0
      %v1612 = vadd.f32 0.0, %v1611
      %1613 = vmatmul.f32.gmra.mxu0 %v1586
      %v1614 = vpop.f32.mrf.mxu0
      %v1615 = vadd.f32 0.0, %v1614
      %1616 = vmatmul.f32.gmra.mxu0 %v1589
      %v1617 = vpop.f32.mrf.mxu0
      %v1618 = vadd.f32 0.0, %v1617
      %1619 = vmatmul.f32.gmra.mxu0 %v1592
      %v1620 = vpop.f32.mrf.mxu0
      %v1621 = vadd.f32 0.0, %v1620
      %1622 = vdwg.mxu0
      %s1623 = scalar_lea.vmem %s7, 1
      %v1624 = vld [vmem:[%s1623] sm:$0x1]
      %v1626 = vperm.slane %v1624, 0
      %v1628 = vmul.f32 %v1612, %v1626
      %v1629 = vmul.f32 %v1615, %v1626
      %v1630 = vmul.f32 %v1618, %v1626
      %v1631 = vmul.f32 %v1621, %v1626
      %v1632 = vsel %vm469, %v1628, 0.0
      %1633 = vadd.xlane.f32.xlu0 %v1632
      %v1634 = vpop.xlane.xlu0 %1633
      %v1635 = vsel %vm469, %v1629, 0.0
      %1636 = vadd.xlane.f32.xlu0 %v1635
      %v1637 = vpop.xlane.xlu0 %1636
      %v1638 = vsel %vm469, %v1630, 0.0
      %1639 = vadd.xlane.f32.xlu0 %v1638
      %v1640 = vpop.xlane.xlu0 %1639
      %v1641 = vsel %vm1569, %v1631, 0.0
      %1642 = vadd.xlane.f32.xlu0 %v1641
      %v1643 = vpop.xlane.xlu0 %1642
      %v1644 = vadd.f32 %v1573, %v1634
      %v1645 = vadd.f32 %v1574, %v1637
      %v1646 = vadd.f32 %v1575, %v1640
      %v1647 = vadd.f32 %v1576, %v1643
      %s1648 = scalar_lea.vmem %s6, 64
      %v1649 = vld [vmem:[%s1648] sm:$0xff]
      %v1650 = vld [vmem:[%s1648 + $0x8] sm:$0xff]
      %v1651 = vld [vmem:[%s1648 + $0x10] sm:$0xff]
      %v1652 = vld [vmem:[%s1648 + $0x18] sm:$0x1]
      %v1654 = vsel %vm1510, %v1649, 0
      %v1657 = vsel %vm1510, %v1650, 0
      %v1660 = vsel %vm1510, %v1651, 0
      %v1663 = vsel %vm1510, %v1652, 0
      %1665 = vmatpush.msra.mxu0 0.0
      %1666 = vmatpush.msra.mxu0 0.0
      %1667 = vmatpush.msra.mxu0 0.0
      %1668 = vmatpush.msra.mxu0 0.0
      %1669 = vmatpush.msra.mxu0 0.0
      %1670 = vmatpush.msra.mxu0 0.0
      %1671 = vmatpush.msra.mxu0 0.0
      %1672 = vmatpush.msra.mxu0 0.0
      %1673 = vmatpush.msra.mxu0 0.0
      %1674 = vmatpush.msra.mxu0 0.0
      %1675 = vmatpush.msra.mxu0 0.0
      %1676 = vmatpush.msra.mxu0 0.0
      %1677 = vmatpush.msra.mxu0 0.0
      %1678 = vmatpush.msra.mxu0 0.0
      %1679 = vmatpush.msra.mxu0 %v1505
      %1680 = vmatpush.msra.mxu0 %v1504
      %1681 = vmatmul.f32.gmra.mxu0 %v1654
      %v1682 = vpop.f32.mrf.mxu0
      %v1683 = vadd.f32 0.0, %v1682
      %1684 = vmatmul.f32.gmra.mxu0 %v1657
      %v1685 = vpop.f32.mrf.mxu0
      %v1686 = vadd.f32 0.0, %v1685
      %1687 = vmatmul.f32.gmra.mxu0 %v1660
      %v1688 = vpop.f32.mrf.mxu0
      %v1689 = vadd.f32 0.0, %v1688
      %1690 = vmatmul.f32.gmra.mxu0 %v1663
      %v1691 = vpop.f32.mrf.mxu0
      %v1692 = vadd.f32 0.0, %v1691
      %1693 = vdwg.mxu0
      %s1694 = scalar_lea.vmem %s7, 2
      %v1695 = vld [vmem:[%s1694] sm:$0x1]
      %v1697 = vperm.slane %v1695, 0
      %v1699 = vmul.f32 %v1683, %v1697
      %v1700 = vmul.f32 %v1686, %v1697
      %v1701 = vmul.f32 %v1689, %v1697
      %v1702 = vmul.f32 %v1692, %v1697
      %v1703 = vsel %vm469, %v1699, 0.0
      %1704 = vadd.xlane.f32.xlu0 %v1703
      %v1705 = vpop.xlane.xlu0 %1704
      %v1706 = vsel %vm469, %v1700, 0.0
      %1707 = vadd.xlane.f32.xlu0 %v1706
      %v1708 = vpop.xlane.xlu0 %1707
      %v1709 = vsel %vm469, %v1701, 0.0
      %1710 = vadd.xlane.f32.xlu0 %v1709
      %v1711 = vpop.xlane.xlu0 %1710
      %v1712 = vsel %vm1569, %v1702, 0.0
      %1713 = vadd.xlane.f32.xlu0 %v1712
      %v1714 = vpop.xlane.xlu0 %1713
      %v1715 = vadd.f32 %v1644, %v1705
      %v1716 = vadd.f32 %v1645, %v1708
      %v1717 = vadd.f32 %v1646, %v1711
      %v1718 = vadd.f32 %v1647, %v1714
      %s1719 = scalar_lea.vmem %s6, 96
      %v1720 = vld [vmem:[%s1719] sm:$0xff]
      %v1721 = vld [vmem:[%s1719 + $0x8] sm:$0xff]
      %v1722 = vld [vmem:[%s1719 + $0x10] sm:$0xff]
      %v1723 = vld [vmem:[%s1719 + $0x18] sm:$0x1]
      %v1725 = vsel %vm1510, %v1720, 0
      %v1728 = vsel %vm1510, %v1721, 0
      %v1731 = vsel %vm1510, %v1722, 0
      %v1734 = vsel %vm1510, %v1723, 0
      %1736 = vmatpush.msra.mxu0 0.0
      %1737 = vmatpush.msra.mxu0 0.0
      %1738 = vmatpush.msra.mxu0 0.0
      %1739 = vmatpush.msra.mxu0 0.0
      %1740 = vmatpush.msra.mxu0 0.0
      %1741 = vmatpush.msra.mxu0 0.0
      %1742 = vmatpush.msra.mxu0 0.0
      %1743 = vmatpush.msra.mxu0 0.0
      %1744 = vmatpush.msra.mxu0 0.0
      %1745 = vmatpush.msra.mxu0 0.0
      %1746 = vmatpush.msra.mxu0 0.0
      %1747 = vmatpush.msra.mxu0 0.0
      %1748 = vmatpush.msra.mxu0 0.0
      %1749 = vmatpush.msra.mxu0 0.0
      %1750 = vmatpush.msra.mxu0 %v1505
      %1751 = vmatpush.msra.mxu0 %v1504
      %1752 = vmatmul.f32.gmra.mxu0 %v1725
      %v1753 = vpop.f32.mrf.mxu0
      %v1754 = vadd.f32 0.0, %v1753
      %1755 = vmatmul.f32.gmra.mxu0 %v1728
      %v1756 = vpop.f32.mrf.mxu0
      %v1757 = vadd.f32 0.0, %v1756
      %1758 = vmatmul.f32.gmra.mxu0 %v1731
      %v1759 = vpop.f32.mrf.mxu0
      %v1760 = vadd.f32 0.0, %v1759
      %1761 = vmatmul.f32.gmra.mxu0 %v1734
      %v1762 = vpop.f32.mrf.mxu0
      %v1763 = vadd.f32 0.0, %v1762
      %1764 = vdwg.mxu0
      %s1765 = scalar_lea.vmem %s7, 3
      %v1766 = vld [vmem:[%s1765] sm:$0x1]
      %v1768 = vperm.slane %v1766, 0
      %v1770 = vmul.f32 %v1754, %v1768
      %v1771 = vmul.f32 %v1757, %v1768
      %v1772 = vmul.f32 %v1760, %v1768
      %v1773 = vmul.f32 %v1763, %v1768
      %v1774 = vsel %vm469, %v1770, 0.0
      %1775 = vadd.xlane.f32.xlu0 %v1774
      %v1776 = vpop.xlane.xlu0 %1775
      %v1777 = vsel %vm469, %v1771, 0.0
      %1778 = vadd.xlane.f32.xlu0 %v1777
      %v1779 = vpop.xlane.xlu0 %1778
      %v1780 = vsel %vm469, %v1772, 0.0
      %1781 = vadd.xlane.f32.xlu0 %v1780
      %v1782 = vpop.xlane.xlu0 %1781
      %v1783 = vsel %vm1569, %v1773, 0.0
      %1784 = vadd.xlane.f32.xlu0 %v1783
      %v1785 = vpop.xlane.xlu0 %1784
      %v1786 = vadd.f32 %v1715, %v1776
      %v1787 = vadd.f32 %v1716, %v1779
      %v1788 = vadd.f32 %v1717, %v1782
      %v1789 = vadd.f32 %v1718, %v1785
      %v1790 = vld [vmem:[#allocation2] sm:$0x1]
      %v1792 = vperm.slane %v1790, 0
      %v1794 = vadd.f32 %v1786, %v1792
      %v1795 = vadd.f32 %v1787, %v1792
      %v1796 = vadd.f32 %v1788, %v1792
      %v1797 = vadd.f32 %v1789, %v1792
      %vm1798 = vcmask 7168
      %1799 = vst.msk [vmem:[%s334] sm:$0xff] %vm1798, %v1794
      %1800 = vst.msk [vmem:[%s334 + $0x8] sm:$0xff] %vm1798, %v1795
      %1801 = vst.msk [vmem:[%s334 + $0x10] sm:$0xff] %vm1798, %v1796
      %vm1802 = vcmask 0
      %1803 = vst.msk [vmem:[%s334 + $0x18] sm:$0x1] %vm1802, %v1797
      %p1804 = scmp.lt.s32.totalorder %s22, 1
      %s1805 = scalar_select %p1804, %s22, 1
      %s1806 = smul.addr %s1805, 4
      %s1807 = smul.addr %s1806, 8
      %s1808 = scalar_lea.vmem %s9, %s1807
      // Predicated region
      $region57: #{discriminator_forward.1} parent=55 // pred_check
        %p1809 = pneg %p234
      $region58: #{discriminator_forward.1} parent=55 // pred_check_branch
        %1811 = sbr.rel (%p1809) target = $region60
      $region59: #{discriminator_forward.1} parent=55 // pred_region
        _
      $region60: #{discriminator_forward.1} parent=55 // pred_fallthru
        _
    $region56: #{discriminator_forward.1} parent=5 // pred_fallthru
      _
    %p1812 = scmp.le.s32.totalorder 2, %s17
    // Predicated region
    $region61: #{discriminator_forward.1} parent=5 // pred_check
      %p1813 = pneg %p1812
    $region62: #{discriminator_forward.1} parent=5 // pred_check_branch
      %1815 = sbr.rel (%p1813) target = $region64
    $region63: #{discriminator_forward.1} parent=5 // pred_region
      %s1816 = ssub.s32 %s17, 2
      // Predicated region
      $region65: #{discriminator_forward.1} parent=63 // pred_check
        %p1817 = pneg %p240
      $region66: #{discriminator_forward.1} parent=63 // pred_check_branch
        %1819 = sbr.rel (%p1817) target = $region68
      $region67: #{discriminator_forward.1} parent=63 // pred_region
        %p1820 = scmp.lt.s32.totalorder %s23, 1
        %s1821 = scalar_select %p1820, %s23, 1
        %s1822 = smul.addr %s1821, 4
        %s1823 = smul.addr %s1822, 8
        %s1824 = scalar_lea.vmem %s9, %s1823
      $region68: #{discriminator_forward.1} parent=63 // pred_fallthru
        _
    $region64: #{discriminator_forward.1} parent=5 // pred_fallthru
      _
  $region6: #{discriminator_forward.1} parent=0 // loop_footer
    %s21 = sadd.s32 1, %s17
  $region7: #{discriminator_forward.1} parent=0 // loop_footer_branch
    %16 = sbr.rel target = $region3
  $region8: #{discriminator_forward.1} parent=0 // loop_exit
    _

</llo_original>
